<compile_context>
chip_gen: v7x
topology: tpu7x:2x2x1
jax: 0.10.0
libtpu: 0.0.40
codegen_flags: <defaults>
</compile_context>

<pallas_src>
import functools

import jax
import jax.numpy as jnp
from jax.experimental import pallas as pl
from jax.experimental.pallas import tpu as pltpu


# ----------------------------------------------------------------------------
# Fused kernel: 3x3 conv (im2col, SAME) + ReLU + both heads + cat + sigmoid.
# One grid step = one batch element.
# ----------------------------------------------------------------------------
def yolonas_fused_kernel(x_ref, w1f_ref, b1_ref, wct_ref, bct_ref, o_ref,
                         xpad_ref, patch_ref):
    # x_ref    : (1, H, W, Cin)       unpadded NHWC input tile
    # w1f_ref  : (Kpad, Cmid)         im2col conv weights (rows >= 9*Cin are 0)
    # b1_ref   : (1, Cmid)
    # wct_ref  : (4+NC, Cmid)         pre-concatenated [box; cls] head weights
    # bct_ref  : (4+NC, 1)
    # o_ref    : (1, 4+NC, H*W)       lane-dense transposed output
    # xpad_ref : (H+2, W+2, Cin)      VMEM scratch (SAME-padding halo)
    # patch_ref: (H*W, Kpad)          VMEM scratch (im2col patches)
    H, W, Cin = x_ref.shape[1], x_ref.shape[2], x_ref.shape[3]
    N = H * W
    cd = w1f_ref.dtype  # MXU compute dtype (float32 or bfloat16)

    # -- SAME-padding halo built in VMEM: no jnp.pad / padded HBM array. --
    xpad_ref[...] = jnp.zeros_like(xpad_ref)
    xpad_ref[1:H + 1, 1:W + 1, :] = x_ref[0]

    # -- im2col: one (H*W, Kpad) patch matrix.  Columns >= 9*Cin stay zero
    #    (they pair with the zero-padded rows of w1f); they must be zeroed
    #    (not garbage) because 0 * NaN != 0.  Full zero of the (N, Kpad)
    #    scratch is a handful of unmasked full-lane stores -> cheaper than a
    #    narrow masked store of only the tail columns. --
    patch_ref[...] = jnp.zeros_like(patch_ref)
    for dy in range(3):
        for dx in range(3):
            k0 = (dy * 3 + dx) * Cin
            patch_ref[:, k0:k0 + Cin] = (
                xpad_ref[dy:dy + H, dx:dx + W, :].reshape(N, Cin))

    # -- Stem 3x3 conv as ONE MXU matmul + bias + ReLU (f32 accumulation). --
    feat = jnp.dot(patch_ref[...].astype(cd), w1f_ref[...],
                   preferred_element_type=jnp.float32)
    feat = jnp.maximum(feat + b1_ref[...], 0.0)             # (N, Cmid), f32

    # -- Fused heads + torch.cat(dim=-1): one matmul against the
    #    pre-concatenated weights, emitted lane-dense as (4+NC, N). --
    feat_t = jnp.transpose(feat)                             # (Cmid, N)
    out_t = jnp.dot(wct_ref[...], feat_t.astype(cd),
                    preferred_element_type=jnp.float32) + bct_ref[...]
    # sigmoid only on the class rows (rows >= 4); box rows stay linear.
    row = jax.lax.broadcasted_iota(jnp.int32, out_t.shape, 0)
    out_t = jnp.where(row >= 4, jax.nn.sigmoid(out_t), out_t)
    o_ref[0] = out_t.astype(o_ref.dtype)


# ----------------------------------------------------------------------------
# One-time weight layout preparation (fuses torch.cat into the head weights).
# ----------------------------------------------------------------------------
def prepare_params(params, compute_dtype=jnp.float32):
    w1, b1, wb, bb, wc, bc = params
    Cin, Cmid = w1.shape[2], w1.shape[3]
    NC = wc.shape[-1]
    NO = 4 + NC
    K = 9 * Cin
    Kpad = ((K + 7) // 8) * 8  # pad im2col contraction dim (27 -> 32)

    # im2col-reshaped conv weights, zero-padded along K.
    w1f = jnp.pad(w1.reshape(K, Cmid), ((0, Kpad - K), (0, 0)))
    w1f = w1f.astype(compute_dtype)
    b1_r = b1.reshape(1, Cmid).astype(jnp.float32)

    # Pre-concatenated head weights/biases (this IS torch.cat(output, dim=-1)),
    # transposed so the kernel writes a lane-dense (NO, N) output block.
    wcat_t = jnp.concatenate([wb, wc], axis=-1).T.astype(compute_dtype)  # (NO, Cmid)
    bcat_t = jnp.concatenate([bb.reshape(-1), bc.reshape(-1)]
                             ).reshape(NO, 1).astype(jnp.float32)
    return (w1f, b1_r, wcat_t, bcat_t)


# ----------------------------------------------------------------------------
# Forward (jitted): input transpose + fused kernel + output transpose.
# ----------------------------------------------------------------------------
@functools.partial(jax.jit)
def yolonas_forward(x_nchw, prepared):
    w1f, b1_r, wcat_t, bcat_t = prepared
    x = jnp.transpose(x_nchw, (0, 2, 3, 1)).astype(jnp.float32)  # NCHW -> NHWC
    B, H, W, Cin = x.shape
    Kpad, Cmid = w1f.shape
    NO = wcat_t.shape[0]
    N = H * W

    out_t = pl.pallas_call(
        yolonas_fused_kernel,
        out_shape=jax.ShapeDtypeStruct((B, NO, N), jnp.float32),
        grid=(B,),
        in_specs=[
            pl.BlockSpec((1, H, W, Cin), lambda b: (b, 0, 0, 0)),
            pl.BlockSpec((Kpad, Cmid), lambda b: (0, 0)),
            pl.BlockSpec((1, Cmid), lambda b: (0, 0)),
            pl.BlockSpec((NO, Cmid), lambda b: (0, 0)),
            pl.BlockSpec((NO, 1), lambda b: (0, 0)),
        ],
        out_specs=pl.BlockSpec((1, NO, N), lambda b: (b, 0, 0)),
        scratch_shapes=[
            pltpu.VMEM((H + 2, W + 2, Cin), jnp.float32),  # halo'd input
            pltpu.VMEM((N, Kpad), jnp.float32),            # im2col patches
        ],
        compiler_params=pltpu.CompilerParams(
            dimension_semantics=("parallel",)),
    )(x, w1f, b1_r, wcat_t, bcat_t)

    # Single cheap transpose back to the PyTorch output layout (B, H*W, 4+NC).
    return jnp.transpose(out_t, (0, 2, 1))


def yolonas_reference(x_nchw, params):
    """Pure-JAX reference for correctness checking."""
    w1, b1, wb, bb, wc, bc = params
    x = jnp.transpose(x_nchw, (0, 2, 3, 1))
    B, H, W, _ = x.shape
    Cmid = w1.shape[-1]
    y = jax.lax.conv_general_dilated(
        x, w1, window_strides=(1, 1), padding="SAME",
        dimension_numbers=("NHWC", "HWIO", "NHWC"))
    y = jnp.maximum(y + b1.reshape(1, 1, 1, -1), 0.0)
    feat = y.reshape(B, H * W, Cmid)
    boxes = feat @ wb + bb
    scores = jax.nn.sigmoid(feat @ wc + bc)
    return jnp.concatenate([boxes, scores], axis=-1)


def make_params(key, cin, cmid, nc):
    k1, k2, k3, k4, k5, k6 = jax.random.split(key, 6)
    w1 = jax.random.normal(k1, (3, 3, cin, cmid), jnp.float32) * 0.1
    b1 = jax.random.normal(k2, (1, cmid), jnp.float32) * 0.1
    wb = jax.random.normal(k3, (cmid, 4), jnp.float32) * 0.1
    bb = jax.random.normal(k4, (1, 4), jnp.float32) * 0.1
    wc = jax.random.normal(k5, (cmid, nc), jnp.float32) * 0.1
    bc = jax.random.normal(k6, (1, nc), jnp.float32) * 0.1
    return (w1, b1, wb, bb, wc, bc)


if __name__ == "__main__":
    B, Cin, H, W = 2, 3, 16, 16
    Cmid, NC = 32, 12

    key = jax.random.PRNGKey(0)
    kx, kp = jax.random.split(key)
    x = jax.random.normal(kx, (B, Cin, H, W), jnp.float32)
    params = make_params(kp, Cin, Cmid, NC)

    ref = jax.block_until_ready(yolonas_reference(x, params))

    # f32 MXU path (all generations).
    prepared_f32 = jax.tree_util.tree_map(
        jax.block_until_ready, prepare_params(params, jnp.float32))
    out = jax.block_until_ready(yolonas_forward(x, prepared_f32))
    assert out.shape == (B, H * W, 4 + NC), out.shape
    assert jnp.allclose(out, ref, atol=1e-4, rtol=1e-3), \
        float(jnp.max(jnp.abs(out - ref)))

    # bf16 MXU path (v6e/v7x optimization): same kernel, bf16 weights/acts,
    # f32 accumulation.
    prepared_bf16 = jax.tree_util.tree_map(
        jax.block_until_ready, prepare_params(params, jnp.bfloat16))
    out_bf16 = jax.block_until_ready(yolonas_forward(x, prepared_bf16))
    assert out_bf16.shape == (B, H * W, 4 + NC), out_bf16.shape
    assert jnp.allclose(out_bf16, ref, atol=5e-2, rtol=5e-2), \
        float(jnp.max(jnp.abs(out_bf16 - ref)))

    print("KERNEL_OK")
</pallas_src>

<mosaic_0001>
module attributes {stable_mosaic.version = 11 : i64} {
  func.func @yolonas_fused_kernel(%arg0: i32, %arg1: memref<1x16x16x3xf32, #tpu.memory_space<vmem>>, %arg2: memref<32x32xf32, #tpu.memory_space<vmem>>, %arg3: memref<1x32xf32, #tpu.memory_space<vmem>>, %arg4: memref<16x32xf32, #tpu.memory_space<vmem>>, %arg5: memref<16x1xf32, #tpu.memory_space<vmem>>, %arg6: memref<1x16x256xf32, #tpu.memory_space<vmem>>, %arg7: memref<18x18x3xf32, #tpu.memory_space<vmem>>, %arg8: memref<256x32xf32, #tpu.memory_space<vmem>>) attributes {dimension_semantics = [#tpu.dimension_semantics<parallel>], iteration_bounds = array<i64: 2>, scalar_prefetch = 0 : i64, scratch_operands = 2 : i64, tpu.core_type = #tpu.core_type<tc>, window_params = [{transform_indices = @transform_0, window_bounds = array<i64: 1, 16, 16, 3>}, {pipeline_mode = #tpu.pipeline_mode<synchronous>, transform_indices = @transform_1, window_bounds = array<i64: 32, 32>}, {pipeline_mode = #tpu.pipeline_mode<synchronous>, transform_indices = @transform_2, window_bounds = array<i64: 1, 32>}, {pipeline_mode = #tpu.pipeline_mode<synchronous>, transform_indices = @transform_3, window_bounds = array<i64: 16, 32>}, {pipeline_mode = #tpu.pipeline_mode<synchronous>, transform_indices = @transform_4, window_bounds = array<i64: 16, 1>}, {transform_indices = @transform_5, window_bounds = array<i64: 1, 16, 256>}]} {
    %cst = arith.constant 0.000000e+00 : f32
    %0 = vector.broadcast %cst : f32 to vector<18x18x3xf32>
    %c0 = arith.constant 0 : index
    %c0_0 = arith.constant 0 : index
    %c0_1 = arith.constant 0 : index
    %1 = vector.load %arg7[%c0, %c0_0, %c0_1] : memref<18x18x3xf32, #tpu.memory_space<vmem>>, vector<18x18x3xf32>
    tpu.vector_store %arg7[%c0, %c0_0, %c0_1], %0 {strides = array<i32>} : memref<18x18x3xf32, #tpu.memory_space<vmem>>, vector<18x18x3xf32>,
    %c0_2 = arith.constant 0 : index
    %c0_3 = arith.constant 0 : index
    %c0_4 = arith.constant 0 : index
    %c0_5 = arith.constant 0 : index
    %2 = vector.load %arg1[%c0_2, %c0_3, %c0_4, %c0_5] : memref<1x16x16x3xf32, #tpu.memory_space<vmem>>, vector<1x16x16x3xf32>
    %3 = vector.shape_cast %2 : vector<1x16x16x3xf32> to vector<16x16x3xf32>
    %c1 = arith.constant 1 : index
    %c1_6 = arith.constant 1 : index
    %c0_7 = arith.constant 0 : index
    %4 = vector.load %arg7[%c1, %c1_6, %c0_7] : memref<18x18x3xf32, #tpu.memory_space<vmem>>, vector<16x16x3xf32>
    tpu.vector_store %arg7[%c1, %c1_6, %c0_7], %3 {strides = array<i32>} : memref<18x18x3xf32, #tpu.memory_space<vmem>>, vector<16x16x3xf32>,
    %cst_8 = arith.constant 0.000000e+00 : f32
    %5 = vector.broadcast %cst_8 : f32 to vector<256x32xf32>
    %c0_9 = arith.constant 0 : index
    %c0_10 = arith.constant 0 : index
    %6 = vector.load %arg8[%c0_9, %c0_10] : memref<256x32xf32, #tpu.memory_space<vmem>>, vector<256x32xf32>
    tpu.vector_store %arg8[%c0_9, %c0_10], %5 {strides = array<i32>} : memref<256x32xf32, #tpu.memory_space<vmem>>, vector<256x32xf32>,
    %c0_11 = arith.constant 0 : index
    %c0_12 = arith.constant 0 : index
    %c0_13 = arith.constant 0 : index
    %7 = vector.load %arg7[%c0_11, %c0_12, %c0_13] : memref<18x18x3xf32, #tpu.memory_space<vmem>>, vector<16x16x3xf32>
    %8 = vector.shape_cast %7 : vector<16x16x3xf32> to vector<256x3xf32>
    %c0_14 = arith.constant 0 : index
    %c0_15 = arith.constant 0 : index
    %9 = vector.load %arg8[%c0_14, %c0_15] : memref<256x32xf32, #tpu.memory_space<vmem>>, vector<256x3xf32>
    tpu.vector_store %arg8[%c0_14, %c0_15], %8 {strides = array<i32>} : memref<256x32xf32, #tpu.memory_space<vmem>>, vector<256x3xf32>,
    %c0_16 = arith.constant 0 : index
    %c1_17 = arith.constant 1 : index
    %c0_18 = arith.constant 0 : index
    %10 = vector.load %arg7[%c0_16, %c1_17, %c0_18] : memref<18x18x3xf32, #tpu.memory_space<vmem>>, vector<16x16x3xf32>
    %11 = vector.shape_cast %10 : vector<16x16x3xf32> to vector<256x3xf32>
    %c0_19 = arith.constant 0 : index
    %c3 = arith.constant 3 : index
    %12 = vector.load %arg8[%c0_19, %c3] : memref<256x32xf32, #tpu.memory_space<vmem>>, vector<256x3xf32>
    tpu.vector_store %arg8[%c0_19, %c3], %11 {strides = array<i32>} : memref<256x32xf32, #tpu.memory_space<vmem>>, vector<256x3xf32>,
    %c0_20 = arith.constant 0 : index
    %c2 = arith.constant 2 : index
    %c0_21 = arith.constant 0 : index
    %13 = vector.load %arg7[%c0_20, %c2, %c0_21] : memref<18x18x3xf32, #tpu.memory_space<vmem>>, vector<16x16x3xf32>
    %14 = vector.shape_cast %13 : vector<16x16x3xf32> to vector<256x3xf32>
    %c0_22 = arith.constant 0 : index
    %c6 = arith.constant 6 : index
    %15 = vector.load %arg8[%c0_22, %c6] : memref<256x32xf32, #tpu.memory_space<vmem>>, vector<256x3xf32>
    tpu.vector_store %arg8[%c0_22, %c6], %14 {strides = array<i32>} : memref<256x32xf32, #tpu.memory_space<vmem>>, vector<256x3xf32>,
    %c1_23 = arith.constant 1 : index
    %c0_24 = arith.constant 0 : index
    %c0_25 = arith.constant 0 : index
    %16 = vector.load %arg7[%c1_23, %c0_24, %c0_25] : memref<18x18x3xf32, #tpu.memory_space<vmem>>, vector<16x16x3xf32>
    %17 = vector.shape_cast %16 : vector<16x16x3xf32> to vector<256x3xf32>
    %c0_26 = arith.constant 0 : index
    %c9 = arith.constant 9 : index
    %18 = vector.load %arg8[%c0_26, %c9] : memref<256x32xf32, #tpu.memory_space<vmem>>, vector<256x3xf32>
    tpu.vector_store %arg8[%c0_26, %c9], %17 {strides = array<i32>} : memref<256x32xf32, #tpu.memory_space<vmem>>, vector<256x3xf32>,
    %c1_27 = arith.constant 1 : index
    %c1_28 = arith.constant 1 : index
    %c0_29 = arith.constant 0 : index
    %19 = vector.load %arg7[%c1_27, %c1_28, %c0_29] : memref<18x18x3xf32, #tpu.memory_space<vmem>>, vector<16x16x3xf32>
    %20 = vector.shape_cast %19 : vector<16x16x3xf32> to vector<256x3xf32>
    %c0_30 = arith.constant 0 : index
    %c12 = arith.constant 12 : index
    %21 = vector.load %arg8[%c0_30, %c12] : memref<256x32xf32, #tpu.memory_space<vmem>>, vector<256x3xf32>
    tpu.vector_store %arg8[%c0_30, %c12], %20 {strides = array<i32>} : memref<256x32xf32, #tpu.memory_space<vmem>>, vector<256x3xf32>,
    %c1_31 = arith.constant 1 : index
    %c2_32 = arith.constant 2 : index
    %c0_33 = arith.constant 0 : index
    %22 = vector.load %arg7[%c1_31, %c2_32, %c0_33] : memref<18x18x3xf32, #tpu.memory_space<vmem>>, vector<16x16x3xf32>
    %23 = vector.shape_cast %22 : vector<16x16x3xf32> to vector<256x3xf32>
    %c0_34 = arith.constant 0 : index
    %c15 = arith.constant 15 : index
    %24 = vector.load %arg8[%c0_34, %c15] : memref<256x32xf32, #tpu.memory_space<vmem>>, vector<256x3xf32>
    tpu.vector_store %arg8[%c0_34, %c15], %23 {strides = array<i32>} : memref<256x32xf32, #tpu.memory_space<vmem>>, vector<256x3xf32>,
    %c2_35 = arith.constant 2 : index
    %c0_36 = arith.constant 0 : index
    %c0_37 = arith.constant 0 : index
    %25 = vector.load %arg7[%c2_35, %c0_36, %c0_37] : memref<18x18x3xf32, #tpu.memory_space<vmem>>, vector<16x16x3xf32>
    %26 = vector.shape_cast %25 : vector<16x16x3xf32> to vector<256x3xf32>
    %c0_38 = arith.constant 0 : index
    %c18 = arith.constant 18 : index
    %27 = vector.load %arg8[%c0_38, %c18] : memref<256x32xf32, #tpu.memory_space<vmem>>, vector<256x3xf32>
    tpu.vector_store %arg8[%c0_38, %c18], %26 {strides = array<i32>} : memref<256x32xf32, #tpu.memory_space<vmem>>, vector<256x3xf32>,
    %c2_39 = arith.constant 2 : index
    %c1_40 = arith.constant 1 : index
    %c0_41 = arith.constant 0 : index
    %28 = vector.load %arg7[%c2_39, %c1_40, %c0_41] : memref<18x18x3xf32, #tpu.memory_space<vmem>>, vector<16x16x3xf32>
    %29 = vector.shape_cast %28 : vector<16x16x3xf32> to vector<256x3xf32>
    %c0_42 = arith.constant 0 : index
    %c21 = arith.constant 21 : index
    %30 = vector.load %arg8[%c0_42, %c21] : memref<256x32xf32, #tpu.memory_space<vmem>>, vector<256x3xf32>
    tpu.vector_store %arg8[%c0_42, %c21], %29 {strides = array<i32>} : memref<256x32xf32, #tpu.memory_space<vmem>>, vector<256x3xf32>,
    %c2_43 = arith.constant 2 : index
    %c2_44 = arith.constant 2 : index
    %c0_45 = arith.constant 0 : index
    %31 = vector.load %arg7[%c2_43, %c2_44, %c0_45] : memref<18x18x3xf32, #tpu.memory_space<vmem>>, vector<16x16x3xf32>
    %32 = vector.shape_cast %31 : vector<16x16x3xf32> to vector<256x3xf32>
    %c0_46 = arith.constant 0 : index
    %c24 = arith.constant 24 : index
    %33 = vector.load %arg8[%c0_46, %c24] : memref<256x32xf32, #tpu.memory_space<vmem>>, vector<256x3xf32>
    tpu.vector_store %arg8[%c0_46, %c24], %32 {strides = array<i32>} : memref<256x32xf32, #tpu.memory_space<vmem>>, vector<256x3xf32>,
    %c0_47 = arith.constant 0 : index
    %c0_48 = arith.constant 0 : index
    %34 = vector.load %arg8[%c0_47, %c0_48] : memref<256x32xf32, #tpu.memory_space<vmem>>, vector<256x32xf32>
    %c0_49 = arith.constant 0 : index
    %c0_50 = arith.constant 0 : index
    %35 = vector.load %arg2[%c0_49, %c0_50] : memref<32x32xf32, #tpu.memory_space<vmem>>, vector<32x32xf32>
    %cst_51 = arith.constant dense<0.000000e+00> : vector<256x32xf32>
    %36 = tpu.matmul %34, %35, %cst_51 {dimension_numbers = #tpu.dot_dimension_numbers<[1], [0], [0], [1], [0, 0, 1, 1], [], []>} : vector<256x32xf32>, vector<32x32xf32>, vector<256x32xf32> -> vector<256x32xf32>
    %c0_52 = arith.constant 0 : index
    %c0_53 = arith.constant 0 : index
    %37 = vector.load %arg3[%c0_52, %c0_53] : memref<1x32xf32, #tpu.memory_space<vmem>>, vector<1x32xf32>
    %38 = vector.broadcast %37 : vector<1x32xf32> to vector<256x32xf32>
    %39 = arith.addf %36, %38 : vector<256x32xf32>
    %cst_54 = arith.constant 0.000000e+00 : f32
    %40 = vector.broadcast %cst_54 : f32 to vector<256x32xf32>
    %41 = arith.maximumf %39, %40 : vector<256x32xf32>
    %42 = tpu.transpose %41, [1, 0] : vector<256x32xf32> -> vector<32x256xf32>
    %c0_55 = arith.constant 0 : index
    %c0_56 = arith.constant 0 : index
    %43 = vector.load %arg4[%c0_55, %c0_56] : memref<16x32xf32, #tpu.memory_space<vmem>>, vector<16x32xf32>
    %cst_57 = arith.constant dense<0.000000e+00> : vector<16x256xf32>
    %44 = tpu.matmul %43, %42, %cst_57 {dimension_numbers = #tpu.dot_dimension_numbers<[1], [0], [0], [1], [0, 0, 1, 1], [], []>} : vector<16x32xf32>, vector<32x256xf32>, vector<16x256xf32> -> vector<16x256xf32>
    %c0_58 = arith.constant 0 : index
    %c0_59 = arith.constant 0 : index
    %45 = vector.load %arg5[%c0_58, %c0_59] : memref<16x1xf32, #tpu.memory_space<vmem>>, vector<16x1xf32>
    %46 = vector.broadcast %45 : vector<16x1xf32> to vector<16x256xf32>
    %47 = arith.addf %44, %46 : vector<16x256xf32>
    %48 = tpu.iota {dimensions = array<i32: 0>} : vector<16x256xi32>
    %c4_i32 = arith.constant 4 : i32
    %49 = vector.broadcast %c4_i32 : i32 to vector<16x256xi32>
    %50 = arith.cmpi sge, %48, %49 : vector<16x256xi32>
    %51 = arith.negf %47 : vector<16x256xf32>
    %52 = math.exp %51 : vector<16x256xf32>
    %cst_60 = arith.constant 1.000000e+00 : f32
    %53 = vector.broadcast %cst_60 : f32 to vector<16x256xf32>
    %54 = arith.addf %53, %52 : vector<16x256xf32>
    %55 = arith.divf %53, %54 : vector<16x256xf32>
    %56 = arith.select %50, %55, %47 : vector<16x256xi1>, vector<16x256xf32>
    %c0_61 = arith.constant 0 : index
    %c0_62 = arith.constant 0 : index
    %c0_63 = arith.constant 0 : index
    %57 = vector.load %arg6[%c0_61, %c0_62, %c0_63] : memref<1x16x256xf32, #tpu.memory_space<vmem>>, vector<1x16x256xf32>
    %58 = vector.shape_cast %57 : vector<1x16x256xf32> to vector<16x256xf32>
    %59 = vector.shape_cast %56 : vector<16x256xf32> to vector<1x16x256xf32>
    tpu.vector_store %arg6[%c0_61, %c0_62, %c0_63], %59 {strides = array<i32>} : memref<1x16x256xf32, #tpu.memory_space<vmem>>, vector<1x16x256xf32>,
    return
  }
  func.func @transform_0(%arg0: i32) -> (i32, i32, i32, i32) {
    %c0_i32 = arith.constant 0 : i32
    %c0_i32_0 = arith.constant 0 : i32
    %c0_i32_1 = arith.constant 0 : i32
    %c0_i32_2 = arith.constant 0 : i32
    return %arg0, %c0_i32, %c0_i32_0, %c0_i32_1 : i32, i32, i32, i32
  }
  func.func @transform_1(%arg0: i32) -> (i32, i32) {
    %c0_i32 = arith.constant 0 : i32
    %c0_i32_0 = arith.constant 0 : i32
    %c0_i32_1 = arith.constant 0 : i32
    return %c0_i32, %c0_i32_0 : i32, i32
  }
  func.func @transform_2(%arg0: i32) -> (i32, i32) {
    %c0_i32 = arith.constant 0 : i32
    %c0_i32_0 = arith.constant 0 : i32
    %c0_i32_1 = arith.constant 0 : i32
    return %c0_i32, %c0_i32_0 : i32, i32
  }
  func.func @transform_3(%arg0: i32) -> (i32, i32) {
    %c0_i32 = arith.constant 0 : i32
    %c0_i32_0 = arith.constant 0 : i32
    %c0_i32_1 = arith.constant 0 : i32
    return %c0_i32, %c0_i32_0 : i32, i32
  }
  func.func @transform_4(%arg0: i32) -> (i32, i32) {
    %c0_i32 = arith.constant 0 : i32
    %c0_i32_0 = arith.constant 0 : i32
    %c0_i32_1 = arith.constant 0 : i32
    return %c0_i32, %c0_i32_0 : i32, i32
  }
  func.func @transform_5(%arg0: i32) -> (i32, i32, i32) {
    %c0_i32 = arith.constant 0 : i32
    %c0_i32_0 = arith.constant 0 : i32
    %c0_i32_1 = arith.constant 0 : i32
    return %arg0, %c0_i32, %c0_i32_0 : i32, i32, i32
  }
}

</mosaic_0001>

<llo_original>
// kernel: yolonas_forward.1
$region0: #{yolonas_forward.1}
  #allocation0 [shape = 'u32[]', space=smem, size = 0x4, offset = 0x4, fixed_abs, tag = 'smem constant byte address 0x4 - core index']
  #allocation1 [shape = 'u32[144,128]{1,0:T(1,128)}', space=vmem, size = 0x12000, scoped, tag = 'internal scratch']
  #allocation2 [shape = 'f32[18,18,3]{2,1,0:T(8,128)}', space=vmem, size = 0x36000, scoped, tag = 'scratch operand']
  #allocation3 [shape = 'f32[256,32]{1,0:T(8,128)}', space=vmem, size = 0x20000, scoped, tag = 'scratch operand']
  %s0 = inlined_call_operand.vmem [shape: f32[2,16,16,3], index: 0, kind: input, shape index: {}]
  %s1 = inlined_call_operand.vmem [shape: f32[32,32], index: 1, kind: input, shape index: {}]
  %s2 = inlined_call_operand.vmem [shape: f32[1,32], index: 2, kind: input, shape index: {}]
  %s3 = inlined_call_operand.vmem [shape: f32[16,32], index: 3, kind: input, shape index: {}]
  %s4 = inlined_call_operand.vmem [shape: f32[16,1], index: 4, kind: input, shape index: {}]
  %s5 = inlined_call_operand.hbm [shape: f32[2,16,256], index: 5, kind: output, shape index: {}]
  %s6 = sld [smem:[#allocation0]]
  $region53: #{yolonas_forward.1} parent=0
    _
  %s8 = ssub.s32 1, %s6
  %s9 = scalar_select 0, %s8, %s6
  $region1: #{yolonas_forward.1} parent=0
    #allocation4 [shape = 'u8[32768]{0}', space=vmem, size = 0x8000, scoped, tag = 'output window, operand 0']
    #allocation5 [shape = 's32[2]{0}', space=sflag, size = 0x8, scoped, tag = 'scoped memory for yolonas_forward.1']
    %10 = vsyncpa [#allocation5], 0
    %s11 = scalar_lea.sflag [#allocation5], 1
    %12 = vsyncpa %s11, 0
    loop: start=0, step=1, limit=4
    $region2: #{yolonas_forward.1} parent=1 // loop_pre_header
      _
    $region3: #{yolonas_forward.1} parent=1 // loop_header
      %s14 = sphi 0, %s18
      %p15 = scmp.ge.s32.totalorder %s14, 4
      %s24 = sphi 0, %s26
      %s27 = sphi 0, %s24
      %s28 = sphi 0, %s27
      %s44 = sphi 0, %s28
      %s48 = sphi 0, %s48
      %s50 = sphi 0, %s48
      %s51 = sphi 0, %s50
      %s65 = sphi 0, %s51
      %s69 = sphi 0, %s69
      %s71 = sphi 0, %s69
      %s72 = sphi 0, %s71
      %s86 = sphi 0, %s72
      %s90 = sphi 0, %s90
      %s92 = sphi 0, %s90
      %s93 = sphi 0, %s92
      %s107 = sphi 0, %s93
      %s111 = sphi 0, %s111
      %s113 = sphi 0, %s111
      %s114 = sphi 0, %s113
      %s128 = sphi 0, %s114
      %s134 = sphi 0, %s136
      %s137 = sphi 0, %s134
      %s138 = sphi 0, %s137
      %s154 = sphi 0, %s138
    $region4: #{yolonas_forward.1} parent=1 // loop_header_branch
      %17 = sbr.rel (%p15) target = $region8
    $region5: #{yolonas_forward.1} parent=1 // loop_body
      %s19 = ssub.s32 %s14, 1
      %s20 = ssub.s32 %s14, 2
      %s21 = sadd.s32 %s14, 1
      %s22 = ssub.s32 %s14, %s21
      %p23 = scmp.eq.s32.totalorder %s22, 0
      %s25 = sadd.s32 %s24, 1
      %s26 = scalar_select %p23, %s24, %s25
      %p29 = pneg %p23
      %p30 = scmp.eq.s32.totalorder %s14, 1
      %p31 = por %p29, %p30
      %p32 = scmp.ne.s32.totalorder %s24, %s27
      %p33 = scmp.eq.s32.totalorder %s14, 0
      %p34 = por %p32, %p33
      %p35 = scmp.ne.s32.totalorder %s24, %s27
      %p36 = scmp.eq.s32.totalorder %s19, 1
      %p37 = por %p35, %p36
      %p38 = scmp.ne.s32.totalorder %s27, %s28
      %p39 = scmp.eq.s32.totalorder %s19, 0
      %p40 = por %p38, %p39
      %p41 = scmp.ne.s32.totalorder %s27, %s28
      %p42 = scmp.eq.s32.totalorder %s20, 1
      %p43 = por %p41, %p42
      %p45 = scmp.ne.s32.totalorder %s28, %s44
      %p46 = scmp.eq.s32.totalorder %s20, 0
      %p47 = por %p45, %p46
      %s49 = sadd.s32 %s48, 1
      %p52 = scmp.eq.s32.totalorder %s14, 1
      %p53 = scmp.ne.s32.totalorder %s48, %s50
      %p54 = scmp.eq.s32.totalorder %s14, 0
      %p55 = por %p53, %p54
      %p56 = scmp.ne.s32.totalorder %s48, %s50
      %p57 = scmp.eq.s32.totalorder %s19, 1
      %p58 = por %p56, %p57
      %p59 = scmp.ne.s32.totalorder %s50, %s51
      %p60 = scmp.eq.s32.totalorder %s19, 0
      %p61 = por %p59, %p60
      %p62 = scmp.ne.s32.totalorder %s50, %s51
      %p63 = scmp.eq.s32.totalorder %s20, 1
      %p64 = por %p62, %p63
      %p66 = scmp.ne.s32.totalorder %s51, %s65
      %p67 = scmp.eq.s32.totalorder %s20, 0
      %p68 = por %p66, %p67
      %s70 = sadd.s32 %s69, 1
      %p73 = scmp.eq.s32.totalorder %s14, 1
      %p74 = scmp.ne.s32.totalorder %s69, %s71
      %p75 = scmp.eq.s32.totalorder %s14, 0
      %p76 = por %p74, %p75
      %p77 = scmp.ne.s32.totalorder %s69, %s71
      %p78 = scmp.eq.s32.totalorder %s19, 1
      %p79 = por %p77, %p78
      %p80 = scmp.ne.s32.totalorder %s71, %s72
      %p81 = scmp.eq.s32.totalorder %s19, 0
      %p82 = por %p80, %p81
      %p83 = scmp.ne.s32.totalorder %s71, %s72
      %p84 = scmp.eq.s32.totalorder %s20, 1
      %p85 = por %p83, %p84
      %p87 = scmp.ne.s32.totalorder %s72, %s86
      %p88 = scmp.eq.s32.totalorder %s20, 0
      %p89 = por %p87, %p88
      %s91 = sadd.s32 %s90, 1
      %p94 = scmp.eq.s32.totalorder %s14, 1
      %p95 = scmp.ne.s32.totalorder %s90, %s92
      %p96 = scmp.eq.s32.totalorder %s14, 0
      %p97 = por %p95, %p96
      %p98 = scmp.ne.s32.totalorder %s90, %s92
      %p99 = scmp.eq.s32.totalorder %s19, 1
      %p100 = por %p98, %p99
      %p101 = scmp.ne.s32.totalorder %s92, %s93
      %p102 = scmp.eq.s32.totalorder %s19, 0
      %p103 = por %p101, %p102
      %p104 = scmp.ne.s32.totalorder %s92, %s93
      %p105 = scmp.eq.s32.totalorder %s20, 1
      %p106 = por %p104, %p105
      %p108 = scmp.ne.s32.totalorder %s93, %s107
      %p109 = scmp.eq.s32.totalorder %s20, 0
      %p110 = por %p108, %p109
      %s112 = sadd.s32 %s111, 1
      %p115 = scmp.eq.s32.totalorder %s14, 1
      %p116 = scmp.ne.s32.totalorder %s111, %s113
      %p117 = scmp.eq.s32.totalorder %s14, 0
      %p118 = por %p116, %p117
      %p119 = scmp.ne.s32.totalorder %s111, %s113
      %p120 = scmp.eq.s32.totalorder %s19, 1
      %p121 = por %p119, %p120
      %p122 = scmp.ne.s32.totalorder %s113, %s114
      %p123 = scmp.eq.s32.totalorder %s19, 0
      %p124 = por %p122, %p123
      %p125 = scmp.ne.s32.totalorder %s113, %s114
      %p126 = scmp.eq.s32.totalorder %s20, 1
      %p127 = por %p125, %p126
      %p129 = scmp.ne.s32.totalorder %s114, %s128
      %p130 = scmp.eq.s32.totalorder %s20, 0
      %p131 = por %p129, %p130
      %s132 = ssub.s32 %s14, %s21
      %p133 = scmp.eq.s32.totalorder %s132, 0
      %s135 = sadd.s32 %s134, 1
      %s136 = scalar_select %p133, %s134, %s135
      %p139 = pneg %p133
      %p140 = scmp.eq.s32.totalorder %s14, 1
      %p141 = por %p139, %p140
      %p142 = scmp.ne.s32.totalorder %s134, %s137
      %p143 = scmp.eq.s32.totalorder %s14, 0
      %p144 = por %p142, %p143
      %p145 = scmp.ne.s32.totalorder %s134, %s137
      %p146 = scmp.eq.s32.totalorder %s19, 1
      %p147 = por %p145, %p146
      %p148 = scmp.ne.s32.totalorder %s137, %s138
      %p149 = scmp.eq.s32.totalorder %s19, 0
      %p150 = por %p148, %p149
      %p151 = scmp.ne.s32.totalorder %s137, %s138
      %p152 = scmp.eq.s32.totalorder %s20, 1
      %p153 = por %p151, %p152
      %p155 = scmp.ne.s32.totalorder %s138, %s154
      %p156 = scmp.eq.s32.totalorder %s20, 0
      %p157 = por %p155, %p156
      %p158 = scmp.le.s32.totalorder 1, %s14
      %p159 = scmp.lt.s32.totalorder %s14, 3
      %p160 = pnand %p158, %p159
      %p161 = pneg %p160
      // Predicated region
      $region9: #{yolonas_forward.1} parent=5 // pred_check
        _
      $region10: #{yolonas_forward.1} parent=5 // pred_check_branch
        %163 = sbr.rel (%p160) target = $region12
      $region11: #{yolonas_forward.1} parent=5 // pred_region
        %s164 = ssub.s32 %s14, 1
        // Predicated region
        $region13: #{yolonas_forward.1} parent=11 // pred_check
          %p165 = pneg %p61
        $region14: #{yolonas_forward.1} parent=11 // pred_check_branch
          %167 = sbr.rel (%p165) target = $region16
        $region15: #{yolonas_forward.1} parent=11 // pred_region
          _
        $region16: #{yolonas_forward.1} parent=11 // pred_fallthru
          _
        // Predicated region
        $region17: #{yolonas_forward.1} parent=11 // pred_check
          %p168 = pneg %p82
        $region18: #{yolonas_forward.1} parent=11 // pred_check_branch
          %170 = sbr.rel (%p168) target = $region20
        $region19: #{yolonas_forward.1} parent=11 // pred_region
          _
        $region20: #{yolonas_forward.1} parent=11 // pred_fallthru
          _
        // Predicated region
        $region21: #{yolonas_forward.1} parent=11 // pred_check
          %p171 = pneg %p103
        $region22: #{yolonas_forward.1} parent=11 // pred_check_branch
          %173 = sbr.rel (%p171) target = $region24
        $region23: #{yolonas_forward.1} parent=11 // pred_region
          _
        $region24: #{yolonas_forward.1} parent=11 // pred_fallthru
          _
        // Predicated region
        $region25: #{yolonas_forward.1} parent=11 // pred_check
          %p174 = pneg %p124
        $region26: #{yolonas_forward.1} parent=11 // pred_check_branch
          %176 = sbr.rel (%p174) target = $region28
        $region27: #{yolonas_forward.1} parent=11 // pred_region
          _
        $region28: #{yolonas_forward.1} parent=11 // pred_fallthru
          _
      $region12: #{yolonas_forward.1} parent=5 // pred_fallthru
        _
      %p177 = scmp.lt.s32.totalorder %s14, 2
      // Predicated region
      $region29: #{yolonas_forward.1} parent=5 // pred_check
        %p178 = pneg %p177
      $region30: #{yolonas_forward.1} parent=5 // pred_check_branch
        %180 = sbr.rel (%p178) target = $region32
      $region31: #{yolonas_forward.1} parent=5 // pred_region
        // Predicated region
        $region33: #{yolonas_forward.1} parent=31 // pred_check
          %p181 = pneg %p34
        $region34: #{yolonas_forward.1} parent=31 // pred_check_branch
          %183 = sbr.rel (%p181) target = $region36
        $region35: #{yolonas_forward.1} parent=31 // pred_region
          %p184 = scmp.lt.s32.totalorder %s14, 1
          %s185 = scalar_select %p184, %s14, 1
          %s186 = smul.addr %s185, 32
          %s187 = smul.addr %s186, 8
          %s188 = scalar_lea.vmem %s0, %s187
        $region36: #{yolonas_forward.1} parent=31 // pred_fallthru
          _
      $region32: #{yolonas_forward.1} parent=5 // pred_fallthru
        _
      %p189 = scmp.le.s32.totalorder 1, %s14
      %p190 = scmp.lt.s32.totalorder %s14, 3
      %p191 = pnand %p189, %p190
      %p192 = pneg %p191
      // Predicated region
      $region37: #{yolonas_forward.1} parent=5 // pred_check
        _
      $region38: #{yolonas_forward.1} parent=5 // pred_check_branch
        %194 = sbr.rel (%p191) target = $region40
      $region39: #{yolonas_forward.1} parent=5 // pred_region
        %s195 = ssub.s32 %s14, 1
        %p196 = scmp.lt.s32.totalorder %s19, 1
        %s197 = scalar_select %p196, %s19, 1
        %s198 = smul.addr %s197, 32
        %s199 = smul.addr %s198, 8
        %s200 = scalar_lea.vmem %s0, %s199
        %p201 = pneg %p40
        %p202 = pneg %p37
        %p203 = pneg %p61
        %p204 = pneg %p58
        %p205 = pneg %p82
        %p206 = pneg %p79
        %p207 = pneg %p103
        %p208 = pneg %p100
        %p209 = pneg %p124
        %p210 = pneg %p121
        %p211 = pneg %p150
        %p212 = pneg %p147
        %s213 = sand.u32 %s137, 1
        %s214 = scalar_lea.sflag [#allocation5], %s213
        %s215 = sand.u32 %s137, 1
        %s216 = smul.addr %s215, 32
        %s217 = scalar_lea.vmem [#allocation4], %s216
        %p218 = scmp.lt.s32.totalorder %s19, 1
        %s219 = scalar_select %p218, %s19, 1
        %s220 = smul.addr %s219, 32
        %s221 = smul.addr %s220, 8
        %s222 = scalar_lea.vmem %s0, %s221
        %vm223 = vcmask 23552
        %224 = vst.msk [vmem:[#allocation2] sm:$0xff] %vm223, 0.0
        %225 = vst.msk [vmem:[#allocation2 + $0x8] sm:$0xff] %vm223, 0.0
        %vm226 = vcmask 17408
        %227 = vst.msk [vmem:[#allocation2 + $0x10] sm:$0x3] %vm226, 0.0
        %228 = vst.msk [vmem:[#allocation2 + $0x18] sm:$0xff] %vm223, 0.0
        %229 = vst.msk [vmem:[#allocation2 + $0x20] sm:$0xff] %vm223, 0.0
        %230 = vst.msk [vmem:[#allocation2 + $0x28] sm:$0x3] %vm226, 0.0
        %231 = vst.msk [vmem:[#allocation2 + $0x30] sm:$0xff] %vm223, 0.0
        %232 = vst.msk [vmem:[#allocation2 + $0x38] sm:$0xff] %vm223, 0.0
        %233 = vst.msk [vmem:[#allocation2 + $0x40] sm:$0x3] %vm226, 0.0
        %234 = vst.msk [vmem:[#allocation2 + $0x48] sm:$0xff] %vm223, 0.0
        %235 = vst.msk [vmem:[#allocation2 + $0x50] sm:$0xff] %vm223, 0.0
        %236 = vst.msk [vmem:[#allocation2 + $0x58] sm:$0x3] %vm226, 0.0
        %237 = vst.msk [vmem:[#allocation2 + $0x60] sm:$0xff] %vm223, 0.0
        %238 = vst.msk [vmem:[#allocation2 + $0x68] sm:$0xff] %vm223, 0.0
        %239 = vst.msk [vmem:[#allocation2 + $0x70] sm:$0x3] %vm226, 0.0
        %240 = vst.msk [vmem:[#allocation2 + $0x78] sm:$0xff] %vm223, 0.0
        %241 = vst.msk [vmem:[#allocation2 + $0x80] sm:$0xff] %vm223, 0.0
        %242 = vst.msk [vmem:[#allocation2 + $0x88] sm:$0x3] %vm226, 0.0
        %243 = vst.msk [vmem:[#allocation2 + $0x90] sm:$0xff] %vm223, 0.0
        %244 = vst.msk [vmem:[#allocation2 + $0x98] sm:$0xff] %vm223, 0.0
        %245 = vst.msk [vmem:[#allocation2 + $0xa0] sm:$0x3] %vm226, 0.0
        %246 = vst.msk [vmem:[#allocation2 + $0xa8] sm:$0xff] %vm223, 0.0
        %247 = vst.msk [vmem:[#allocation2 + $0xb0] sm:$0xff] %vm223, 0.0
        %248 = vst.msk [vmem:[#allocation2 + $0xb8] sm:$0x3] %vm226, 0.0
        %249 = vst.msk [vmem:[#allocation2 + $0xc0] sm:$0xff] %vm223, 0.0
        %250 = vst.msk [vmem:[#allocation2 + $0xc8] sm:$0xff] %vm223, 0.0
        %251 = vst.msk [vmem:[#allocation2 + $0xd0] sm:$0x3] %vm226, 0.0
        %252 = vst.msk [vmem:[#allocation2 + $0xd8] sm:$0xff] %vm223, 0.0
        %253 = vst.msk [vmem:[#allocation2 + $0xe0] sm:$0xff] %vm223, 0.0
        %254 = vst.msk [vmem:[#allocation2 + $0xe8] sm:$0x3] %vm226, 0.0
        %255 = vst.msk [vmem:[#allocation2 + $0xf0] sm:$0xff] %vm223, 0.0
        %256 = vst.msk [vmem:[#allocation2 + $0xf8] sm:$0xff] %vm223, 0.0
        %257 = vst.msk [vmem:[#allocation2 + $0x100] sm:$0x3] %vm226, 0.0
        %258 = vst.msk [vmem:[#allocation2 + $0x108] sm:$0xff] %vm223, 0.0
        %259 = vst.msk [vmem:[#allocation2 + $0x110] sm:$0xff] %vm223, 0.0
        %260 = vst.msk [vmem:[#allocation2 + $0x118] sm:$0x3] %vm226, 0.0
        %261 = vst.msk [vmem:[#allocation2 + $0x120] sm:$0xff] %vm223, 0.0
        %262 = vst.msk [vmem:[#allocation2 + $0x128] sm:$0xff] %vm223, 0.0
        %263 = vst.msk [vmem:[#allocation2 + $0x130] sm:$0x3] %vm226, 0.0
        %264 = vst.msk [vmem:[#allocation2 + $0x138] sm:$0xff] %vm223, 0.0
        %265 = vst.msk [vmem:[#allocation2 + $0x140] sm:$0xff] %vm223, 0.0
        %266 = vst.msk [vmem:[#allocation2 + $0x148] sm:$0x3] %vm226, 0.0
        %267 = vst.msk [vmem:[#allocation2 + $0x150] sm:$0xff] %vm223, 0.0
        %268 = vst.msk [vmem:[#allocation2 + $0x158] sm:$0xff] %vm223, 0.0
        %269 = vst.msk [vmem:[#allocation2 + $0x160] sm:$0x3] %vm226, 0.0
        %270 = vst.msk [vmem:[#allocation2 + $0x168] sm:$0xff] %vm223, 0.0
        %271 = vst.msk [vmem:[#allocation2 + $0x170] sm:$0xff] %vm223, 0.0
        %272 = vst.msk [vmem:[#allocation2 + $0x178] sm:$0x3] %vm226, 0.0
        %273 = vst.msk [vmem:[#allocation2 + $0x180] sm:$0xff] %vm223, 0.0
        %274 = vst.msk [vmem:[#allocation2 + $0x188] sm:$0xff] %vm223, 0.0
        %275 = vst.msk [vmem:[#allocation2 + $0x190] sm:$0x3] %vm226, 0.0
        %276 = vst.msk [vmem:[#allocation2 + $0x198] sm:$0xff] %vm223, 0.0
        %277 = vst.msk [vmem:[#allocation2 + $0x1a0] sm:$0xff] %vm223, 0.0
        %278 = vst.msk [vmem:[#allocation2 + $0x1a8] sm:$0x3] %vm226, 0.0
        %v279 = vld [vmem:[%s222] sm:$0xff]
        %v280 = vld [vmem:[%s222 + $0x8] sm:$0xff]
        %v281 = vld [vmem:[%s222 + $0x10] sm:$0xff]
        %v282 = vld [vmem:[%s222 + $0x18] sm:$0xff]
        %v283 = vld [vmem:[%s222 + $0x20] sm:$0xff]
        %v284 = vld [vmem:[%s222 + $0x28] sm:$0xff]
        %v285 = vld [vmem:[%s222 + $0x30] sm:$0xff]
        %v286 = vld [vmem:[%s222 + $0x38] sm:$0xff]
        %v287 = vld [vmem:[%s222 + $0x40] sm:$0xff]
        %v288 = vld [vmem:[%s222 + $0x48] sm:$0xff]
        %v289 = vld [vmem:[%s222 + $0x50] sm:$0xff]
        %v290 = vld [vmem:[%s222 + $0x58] sm:$0xff]
        %v291 = vld [vmem:[%s222 + $0x60] sm:$0xff]
        %v292 = vld [vmem:[%s222 + $0x68] sm:$0xff]
        %v293 = vld [vmem:[%s222 + $0x70] sm:$0xff]
        %v294 = vld [vmem:[%s222 + $0x78] sm:$0xff]
        %v295 = vld [vmem:[%s222 + $0x80] sm:$0xff]
        %v296 = vld [vmem:[%s222 + $0x88] sm:$0xff]
        %v297 = vld [vmem:[%s222 + $0x90] sm:$0xff]
        %v298 = vld [vmem:[%s222 + $0x98] sm:$0xff]
        %v299 = vld [vmem:[%s222 + $0xa0] sm:$0xff]
        %v300 = vld [vmem:[%s222 + $0xa8] sm:$0xff]
        %v301 = vld [vmem:[%s222 + $0xb0] sm:$0xff]
        %v302 = vld [vmem:[%s222 + $0xb8] sm:$0xff]
        %v303 = vld [vmem:[%s222 + $0xc0] sm:$0xff]
        %v304 = vld [vmem:[%s222 + $0xc8] sm:$0xff]
        %v305 = vld [vmem:[%s222 + $0xd0] sm:$0xff]
        %v306 = vld [vmem:[%s222 + $0xd8] sm:$0xff]
        %v307 = vld [vmem:[%s222 + $0xe0] sm:$0xff]
        %v308 = vld [vmem:[%s222 + $0xe8] sm:$0xff]
        %v309 = vld [vmem:[%s222 + $0xf0] sm:$0xff]
        %v310 = vld [vmem:[%s222 + $0xf8] sm:$0xff]
        %s311 = scalar_lea.vmem [#allocation2], 24
        %312 = vst.msk [vmem:[%s311 + $0x1] sm:$0xff] %vm223, %v279
        %313 = vst.msk [vmem:[%s311 + $0x9] sm:$0xff] %vm223, %v280
        %314 = vst.msk [vmem:[%s311 + $0x19] sm:$0xff] %vm223, %v281
        %315 = vst.msk [vmem:[%s311 + $0x21] sm:$0xff] %vm223, %v282
        %316 = vst.msk [vmem:[%s311 + $0x31] sm:$0xff] %vm223, %v283
        %317 = vst.msk [vmem:[%s311 + $0x39] sm:$0xff] %vm223, %v284
        %318 = vst.msk [vmem:[%s311 + $0x49] sm:$0xff] %vm223, %v285
        %319 = vst.msk [vmem:[%s311 + $0x51] sm:$0xff] %vm223, %v286
        %320 = vst.msk [vmem:[%s311 + $0x61] sm:$0xff] %vm223, %v287
        %321 = vst.msk [vmem:[%s311 + $0x69] sm:$0xff] %vm223, %v288
        %322 = vst.msk [vmem:[%s311 + $0x79] sm:$0xff] %vm223, %v289
        %323 = vst.msk [vmem:[%s311 + $0x81] sm:$0xff] %vm223, %v290
        %324 = vst.msk [vmem:[%s311 + $0x91] sm:$0xff] %vm223, %v291
        %325 = vst.msk [vmem:[%s311 + $0x99] sm:$0xff] %vm223, %v292
        %326 = vst.msk [vmem:[%s311 + $0xa9] sm:$0xff] %vm223, %v293
        %327 = vst.msk [vmem:[%s311 + $0xb1] sm:$0xff] %vm223, %v294
        %328 = vst.msk [vmem:[%s311 + $0xc1] sm:$0xff] %vm223, %v295
        %329 = vst.msk [vmem:[%s311 + $0xc9] sm:$0xff] %vm223, %v296
        %330 = vst.msk [vmem:[%s311 + $0xd9] sm:$0xff] %vm223, %v297
        %331 = vst.msk [vmem:[%s311 + $0xe1] sm:$0xff] %vm223, %v298
        %332 = vst.msk [vmem:[%s311 + $0xf1] sm:$0xff] %vm223, %v299
        %333 = vst.msk [vmem:[%s311 + $0xf9] sm:$0xff] %vm223, %v300
        %334 = vst.msk [vmem:[%s311 + $0x109] sm:$0xff] %vm223, %v301
        %335 = vst.msk [vmem:[%s311 + $0x111] sm:$0xff] %vm223, %v302
        %336 = vst.msk [vmem:[%s311 + $0x121] sm:$0xff] %vm223, %v303
        %337 = vst.msk [vmem:[%s311 + $0x129] sm:$0xff] %vm223, %v304
        %338 = vst.msk [vmem:[%s311 + $0x139] sm:$0xff] %vm223, %v305
        %339 = vst.msk [vmem:[%s311 + $0x141] sm:$0xff] %vm223, %v306
        %340 = vst.msk [vmem:[%s311 + $0x151] sm:$0xff] %vm223, %v307
        %341 = vst.msk [vmem:[%s311 + $0x159] sm:$0xff] %vm223, %v308
        %342 = vst.msk [vmem:[%s311 + $0x169] sm:$0xff] %vm223, %v309
        %343 = vst.msk [vmem:[%s311 + $0x171] sm:$0xff] %vm223, %v310
        %vm344 = vcmask 261120
        %345 = vst.msk [vmem:[#allocation3] sm:$0xff] %vm344, 0.0
        %346 = vst.msk [vmem:[#allocation3 + $0x8] sm:$0xff] %vm344, 0.0
        %347 = vst.msk [vmem:[#allocation3 + $0x10] sm:$0xff] %vm344, 0.0
        %348 = vst.msk [vmem:[#allocation3 + $0x18] sm:$0xff] %vm344, 0.0
        %349 = vst.msk [vmem:[#allocation3 + $0x20] sm:$0xff] %vm344, 0.0
        %350 = vst.msk [vmem:[#allocation3 + $0x28] sm:$0xff] %vm344, 0.0
        %351 = vst.msk [vmem:[#allocation3 + $0x30] sm:$0xff] %vm344, 0.0
        %352 = vst.msk [vmem:[#allocation3 + $0x38] sm:$0xff] %vm344, 0.0
        %353 = vst.msk [vmem:[#allocation3 + $0x40] sm:$0xff] %vm344, 0.0
        %354 = vst.msk [vmem:[#allocation3 + $0x48] sm:$0xff] %vm344, 0.0
        %355 = vst.msk [vmem:[#allocation3 + $0x50] sm:$0xff] %vm344, 0.0
        %356 = vst.msk [vmem:[#allocation3 + $0x58] sm:$0xff] %vm344, 0.0
        %357 = vst.msk [vmem:[#allocation3 + $0x60] sm:$0xff] %vm344, 0.0
        %358 = vst.msk [vmem:[#allocation3 + $0x68] sm:$0xff] %vm344, 0.0
        %359 = vst.msk [vmem:[#allocation3 + $0x70] sm:$0xff] %vm344, 0.0
        %360 = vst.msk [vmem:[#allocation3 + $0x78] sm:$0xff] %vm344, 0.0
        %361 = vst.msk [vmem:[#allocation3 + $0x80] sm:$0xff] %vm344, 0.0
        %362 = vst.msk [vmem:[#allocation3 + $0x88] sm:$0xff] %vm344, 0.0
        %363 = vst.msk [vmem:[#allocation3 + $0x90] sm:$0xff] %vm344, 0.0
        %364 = vst.msk [vmem:[#allocation3 + $0x98] sm:$0xff] %vm344, 0.0
        %365 = vst.msk [vmem:[#allocation3 + $0xa0] sm:$0xff] %vm344, 0.0
        %366 = vst.msk [vmem:[#allocation3 + $0xa8] sm:$0xff] %vm344, 0.0
        %367 = vst.msk [vmem:[#allocation3 + $0xb0] sm:$0xff] %vm344, 0.0
        %368 = vst.msk [vmem:[#allocation3 + $0xb8] sm:$0xff] %vm344, 0.0
        %369 = vst.msk [vmem:[#allocation3 + $0xc0] sm:$0xff] %vm344, 0.0
        %370 = vst.msk [vmem:[#allocation3 + $0xc8] sm:$0xff] %vm344, 0.0
        %371 = vst.msk [vmem:[#allocation3 + $0xd0] sm:$0xff] %vm344, 0.0
        %372 = vst.msk [vmem:[#allocation3 + $0xd8] sm:$0xff] %vm344, 0.0
        %373 = vst.msk [vmem:[#allocation3 + $0xe0] sm:$0xff] %vm344, 0.0
        %374 = vst.msk [vmem:[#allocation3 + $0xe8] sm:$0xff] %vm344, 0.0
        %375 = vst.msk [vmem:[#allocation3 + $0xf0] sm:$0xff] %vm344, 0.0
        %376 = vst.msk [vmem:[#allocation3 + $0xf8] sm:$0xff] %vm344, 0.0
        %v377 = vld [vmem:[#allocation2] sm:$0xff]
        %v378 = vld [vmem:[#allocation2 + $0x8] sm:$0xff]
        %v379 = vld [vmem:[#allocation2 + $0x18] sm:$0xff]
        %v380 = vld [vmem:[#allocation2 + $0x20] sm:$0xff]
        %v381 = vld [vmem:[#allocation2 + $0x30] sm:$0xff]
        %v382 = vld [vmem:[#allocation2 + $0x38] sm:$0xff]
        %v383 = vld [vmem:[#allocation2 + $0x48] sm:$0xff]
        %v384 = vld [vmem:[#allocation2 + $0x50] sm:$0xff]
        %v385 = vld [vmem:[#allocation2 + $0x60] sm:$0xff]
        %v386 = vld [vmem:[#allocation2 + $0x68] sm:$0xff]
        %v387 = vld [vmem:[#allocation2 + $0x78] sm:$0xff]
        %v388 = vld [vmem:[#allocation2 + $0x80] sm:$0xff]
        %v389 = vld [vmem:[#allocation2 + $0x90] sm:$0xff]
        %v390 = vld [vmem:[#allocation2 + $0x98] sm:$0xff]
        %v391 = vld [vmem:[#allocation2 + $0xa8] sm:$0xff]
        %v392 = vld [vmem:[#allocation2 + $0xb0] sm:$0xff]
        %v393 = vld [vmem:[#allocation2 + $0xc0] sm:$0xff]
        %v394 = vld [vmem:[#allocation2 + $0xc8] sm:$0xff]
        %v395 = vld [vmem:[#allocation2 + $0xd8] sm:$0xff]
        %v396 = vld [vmem:[#allocation2 + $0xe0] sm:$0xff]
        %v397 = vld [vmem:[#allocation2 + $0xf0] sm:$0xff]
        %v398 = vld [vmem:[#allocation2 + $0xf8] sm:$0xff]
        %v399 = vld [vmem:[#allocation2 + $0x108] sm:$0xff]
        %v400 = vld [vmem:[#allocation2 + $0x110] sm:$0xff]
        %v401 = vld [vmem:[#allocation2 + $0x120] sm:$0xff]
        %v402 = vld [vmem:[#allocation2 + $0x128] sm:$0xff]
        %v403 = vld [vmem:[#allocation2 + $0x138] sm:$0xff]
        %v404 = vld [vmem:[#allocation2 + $0x140] sm:$0xff]
        %v405 = vld [vmem:[#allocation2 + $0x150] sm:$0xff]
        %v406 = vld [vmem:[#allocation2 + $0x158] sm:$0xff]
        %v407 = vld [vmem:[#allocation2 + $0x168] sm:$0xff]
        %v408 = vld [vmem:[#allocation2 + $0x170] sm:$0xff]
        %409 = vst.msk [vmem:[#allocation3] sm:$0xff] %vm223, %v377
        %410 = vst.msk [vmem:[#allocation3 + $0x8] sm:$0xff] %vm223, %v378
        %411 = vst.msk [vmem:[#allocation3 + $0x10] sm:$0xff] %vm223, %v379
        %412 = vst.msk [vmem:[#allocation3 + $0x18] sm:$0xff] %vm223, %v380
        %413 = vst.msk [vmem:[#allocation3 + $0x20] sm:$0xff] %vm223, %v381
        %414 = vst.msk [vmem:[#allocation3 + $0x28] sm:$0xff] %vm223, %v382
        %415 = vst.msk [vmem:[#allocation3 + $0x30] sm:$0xff] %vm223, %v383
        %416 = vst.msk [vmem:[#allocation3 + $0x38] sm:$0xff] %vm223, %v384
        %417 = vst.msk [vmem:[#allocation3 + $0x40] sm:$0xff] %vm223, %v385
        %418 = vst.msk [vmem:[#allocation3 + $0x48] sm:$0xff] %vm223, %v386
        %419 = vst.msk [vmem:[#allocation3 + $0x50] sm:$0xff] %vm223, %v387
        %420 = vst.msk [vmem:[#allocation3 + $0x58] sm:$0xff] %vm223, %v388
        %421 = vst.msk [vmem:[#allocation3 + $0x60] sm:$0xff] %vm223, %v389
        %422 = vst.msk [vmem:[#allocation3 + $0x68] sm:$0xff] %vm223, %v390
        %423 = vst.msk [vmem:[#allocation3 + $0x70] sm:$0xff] %vm223, %v391
        %424 = vst.msk [vmem:[#allocation3 + $0x78] sm:$0xff] %vm223, %v392
        %425 = vst.msk [vmem:[#allocation3 + $0x80] sm:$0xff] %vm223, %v393
        %426 = vst.msk [vmem:[#allocation3 + $0x88] sm:$0xff] %vm223, %v394
        %427 = vst.msk [vmem:[#allocation3 + $0x90] sm:$0xff] %vm223, %v395
        %428 = vst.msk [vmem:[#allocation3 + $0x98] sm:$0xff] %vm223, %v396
        %429 = vst.msk [vmem:[#allocation3 + $0xa0] sm:$0xff] %vm223, %v397
        %430 = vst.msk [vmem:[#allocation3 + $0xa8] sm:$0xff] %vm223, %v398
        %431 = vst.msk [vmem:[#allocation3 + $0xb0] sm:$0xff] %vm223, %v399
        %432 = vst.msk [vmem:[#allocation3 + $0xb8] sm:$0xff] %vm223, %v400
        %433 = vst.msk [vmem:[#allocation3 + $0xc0] sm:$0xff] %vm223, %v401
        %434 = vst.msk [vmem:[#allocation3 + $0xc8] sm:$0xff] %vm223, %v402
        %435 = vst.msk [vmem:[#allocation3 + $0xd0] sm:$0xff] %vm223, %v403
        %436 = vst.msk [vmem:[#allocation3 + $0xd8] sm:$0xff] %vm223, %v404
        %437 = vst.msk [vmem:[#allocation3 + $0xe0] sm:$0xff] %vm223, %v405
        %438 = vst.msk [vmem:[#allocation3 + $0xe8] sm:$0xff] %vm223, %v406
        %439 = vst.msk [vmem:[#allocation3 + $0xf0] sm:$0xff] %vm223, %v407
        %440 = vst.msk [vmem:[#allocation3 + $0xf8] sm:$0xff] %vm223, %v408
        %v441 = vld [vmem:[#allocation2 + $0x1] sm:$0xff]
        %v442 = vld [vmem:[#allocation2 + $0x9] sm:$0xff]
        %v443 = vld [vmem:[#allocation2 + $0x19] sm:$0xff]
        %v444 = vld [vmem:[#allocation2 + $0x21] sm:$0xff]
        %v445 = vld [vmem:[#allocation2 + $0x31] sm:$0xff]
        %v446 = vld [vmem:[#allocation2 + $0x39] sm:$0xff]
        %v447 = vld [vmem:[#allocation2 + $0x49] sm:$0xff]
        %v448 = vld [vmem:[#allocation2 + $0x51] sm:$0xff]
        %v449 = vld [vmem:[#allocation2 + $0x61] sm:$0xff]
        %v450 = vld [vmem:[#allocation2 + $0x69] sm:$0xff]
        %v451 = vld [vmem:[#allocation2 + $0x79] sm:$0xff]
        %v452 = vld [vmem:[#allocation2 + $0x81] sm:$0xff]
        %v453 = vld [vmem:[#allocation2 + $0x91] sm:$0xff]
        %v454 = vld [vmem:[#allocation2 + $0x99] sm:$0xff]
        %v455 = vld [vmem:[#allocation2 + $0xa9] sm:$0xff]
        %v456 = vld [vmem:[#allocation2 + $0xb1] sm:$0xff]
        %v457 = vld [vmem:[#allocation2 + $0xc1] sm:$0xff]
        %v458 = vld [vmem:[#allocation2 + $0xc9] sm:$0xff]
        %v459 = vld [vmem:[#allocation2 + $0xd9] sm:$0xff]
        %v460 = vld [vmem:[#allocation2 + $0xe1] sm:$0xff]
        %v461 = vld [vmem:[#allocation2 + $0xf1] sm:$0xff]
        %v462 = vld [vmem:[#allocation2 + $0xf9] sm:$0xff]
        %v463 = vld [vmem:[#allocation2 + $0x109] sm:$0xff]
        %v464 = vld [vmem:[#allocation2 + $0x111] sm:$0xff]
        %v465 = vld [vmem:[#allocation2 + $0x121] sm:$0xff]
        %v466 = vld [vmem:[#allocation2 + $0x129] sm:$0xff]
        %v467 = vld [vmem:[#allocation2 + $0x139] sm:$0xff]
        %v468 = vld [vmem:[#allocation2 + $0x141] sm:$0xff]
        %v469 = vld [vmem:[#allocation2 + $0x151] sm:$0xff]
        %v470 = vld [vmem:[#allocation2 + $0x159] sm:$0xff]
        %v471 = vld [vmem:[#allocation2 + $0x169] sm:$0xff]
        %v472 = vld [vmem:[#allocation2 + $0x171] sm:$0xff]
        %505 = vrot.lane.b32.xlu0 %v441, 3
        %v506 = vpop.permute.xlu0 %505
        %507 = vrot.lane.b32.xlu0 %v442, 3
        %v508 = vpop.permute.xlu0 %507
        %509 = vrot.lane.b32.xlu0 %v443, 3
        %v510 = vpop.permute.xlu0 %509
        %511 = vrot.lane.b32.xlu0 %v444, 3
        %v512 = vpop.permute.xlu0 %511
        %513 = vrot.lane.b32.xlu0 %v445, 3
        %v514 = vpop.permute.xlu0 %513
        %515 = vrot.lane.b32.xlu0 %v446, 3
        %v516 = vpop.permute.xlu0 %515
        %517 = vrot.lane.b32.xlu0 %v447, 3
        %v518 = vpop.permute.xlu0 %517
        %519 = vrot.lane.b32.xlu0 %v448, 3
        %v520 = vpop.permute.xlu0 %519
        %521 = vrot.lane.b32.xlu0 %v449, 3
        %v522 = vpop.permute.xlu0 %521
        %523 = vrot.lane.b32.xlu0 %v450, 3
        %v524 = vpop.permute.xlu0 %523
        %525 = vrot.lane.b32.xlu0 %v451, 3
        %v526 = vpop.permute.xlu0 %525
        %527 = vrot.lane.b32.xlu0 %v452, 3
        %v528 = vpop.permute.xlu0 %527
        %529 = vrot.lane.b32.xlu0 %v453, 3
        %v530 = vpop.permute.xlu0 %529
        %531 = vrot.lane.b32.xlu0 %v454, 3
        %v532 = vpop.permute.xlu0 %531
        %533 = vrot.lane.b32.xlu0 %v455, 3
        %v534 = vpop.permute.xlu0 %533
        %535 = vrot.lane.b32.xlu0 %v456, 3
        %v536 = vpop.permute.xlu0 %535
        %537 = vrot.lane.b32.xlu0 %v457, 3
        %v538 = vpop.permute.xlu0 %537
        %539 = vrot.lane.b32.xlu0 %v458, 3
        %v540 = vpop.permute.xlu0 %539
        %541 = vrot.lane.b32.xlu0 %v459, 3
        %v542 = vpop.permute.xlu0 %541
        %543 = vrot.lane.b32.xlu0 %v460, 3
        %v544 = vpop.permute.xlu0 %543
        %545 = vrot.lane.b32.xlu0 %v461, 3
        %v546 = vpop.permute.xlu0 %545
        %547 = vrot.lane.b32.xlu0 %v462, 3
        %v548 = vpop.permute.xlu0 %547
        %549 = vrot.lane.b32.xlu0 %v463, 3
        %v550 = vpop.permute.xlu0 %549
        %551 = vrot.lane.b32.xlu0 %v464, 3
        %v552 = vpop.permute.xlu0 %551
        %553 = vrot.lane.b32.xlu0 %v465, 3
        %v554 = vpop.permute.xlu0 %553
        %555 = vrot.lane.b32.xlu0 %v466, 3
        %v556 = vpop.permute.xlu0 %555
        %557 = vrot.lane.b32.xlu0 %v467, 3
        %v558 = vpop.permute.xlu0 %557
        %559 = vrot.lane.b32.xlu0 %v468, 3
        %v560 = vpop.permute.xlu0 %559
        %561 = vrot.lane.b32.xlu0 %v469, 3
        %v562 = vpop.permute.xlu0 %561
        %563 = vrot.lane.b32.xlu0 %v470, 3
        %v564 = vpop.permute.xlu0 %563
        %565 = vrot.lane.b32.xlu0 %v471, 3
        %v566 = vpop.permute.xlu0 %565
        %567 = vrot.lane.b32.xlu0 %v472, 3
        %v568 = vpop.permute.xlu0 %567
        %vm601 = vcmask 48152
        %602 = vst.msk [vmem:[#allocation3] sm:$0xff] %vm601, %v506
        %603 = vst.msk [vmem:[#allocation3 + $0x8] sm:$0xff] %vm601, %v508
        %604 = vst.msk [vmem:[#allocation3 + $0x10] sm:$0xff] %vm601, %v510
        %605 = vst.msk [vmem:[#allocation3 + $0x18] sm:$0xff] %vm601, %v512
        %606 = vst.msk [vmem:[#allocation3 + $0x20] sm:$0xff] %vm601, %v514
        %607 = vst.msk [vmem:[#allocation3 + $0x28] sm:$0xff] %vm601, %v516
        %608 = vst.msk [vmem:[#allocation3 + $0x30] sm:$0xff] %vm601, %v518
        %609 = vst.msk [vmem:[#allocation3 + $0x38] sm:$0xff] %vm601, %v520
        %610 = vst.msk [vmem:[#allocation3 + $0x40] sm:$0xff] %vm601, %v522
        %611 = vst.msk [vmem:[#allocation3 + $0x48] sm:$0xff] %vm601, %v524
        %612 = vst.msk [vmem:[#allocation3 + $0x50] sm:$0xff] %vm601, %v526
        %613 = vst.msk [vmem:[#allocation3 + $0x58] sm:$0xff] %vm601, %v528
        %614 = vst.msk [vmem:[#allocation3 + $0x60] sm:$0xff] %vm601, %v530
        %615 = vst.msk [vmem:[#allocation3 + $0x68] sm:$0xff] %vm601, %v532
        %616 = vst.msk [vmem:[#allocation3 + $0x70] sm:$0xff] %vm601, %v534
        %617 = vst.msk [vmem:[#allocation3 + $0x78] sm:$0xff] %vm601, %v536
        %618 = vst.msk [vmem:[#allocation3 + $0x80] sm:$0xff] %vm601, %v538
        %619 = vst.msk [vmem:[#allocation3 + $0x88] sm:$0xff] %vm601, %v540
        %620 = vst.msk [vmem:[#allocation3 + $0x90] sm:$0xff] %vm601, %v542
        %621 = vst.msk [vmem:[#allocation3 + $0x98] sm:$0xff] %vm601, %v544
        %622 = vst.msk [vmem:[#allocation3 + $0xa0] sm:$0xff] %vm601, %v546
        %623 = vst.msk [vmem:[#allocation3 + $0xa8] sm:$0xff] %vm601, %v548
        %624 = vst.msk [vmem:[#allocation3 + $0xb0] sm:$0xff] %vm601, %v550
        %625 = vst.msk [vmem:[#allocation3 + $0xb8] sm:$0xff] %vm601, %v552
        %626 = vst.msk [vmem:[#allocation3 + $0xc0] sm:$0xff] %vm601, %v554
        %627 = vst.msk [vmem:[#allocation3 + $0xc8] sm:$0xff] %vm601, %v556
        %628 = vst.msk [vmem:[#allocation3 + $0xd0] sm:$0xff] %vm601, %v558
        %629 = vst.msk [vmem:[#allocation3 + $0xd8] sm:$0xff] %vm601, %v560
        %630 = vst.msk [vmem:[#allocation3 + $0xe0] sm:$0xff] %vm601, %v562
        %631 = vst.msk [vmem:[#allocation3 + $0xe8] sm:$0xff] %vm601, %v564
        %632 = vst.msk [vmem:[#allocation3 + $0xf0] sm:$0xff] %vm601, %v566
        %633 = vst.msk [vmem:[#allocation3 + $0xf8] sm:$0xff] %vm601, %v568
        %v634 = vld [vmem:[#allocation2 + $0x2] sm:$0xff]
        %v635 = vld [vmem:[#allocation2 + $0xa] sm:$0xff]
        %v636 = vld [vmem:[#allocation2 + $0x1a] sm:$0xff]
        %v637 = vld [vmem:[#allocation2 + $0x22] sm:$0xff]
        %v638 = vld [vmem:[#allocation2 + $0x32] sm:$0xff]
        %v639 = vld [vmem:[#allocation2 + $0x3a] sm:$0xff]
        %v640 = vld [vmem:[#allocation2 + $0x4a] sm:$0xff]
        %v641 = vld [vmem:[#allocation2 + $0x52] sm:$0xff]
        %v642 = vld [vmem:[#allocation2 + $0x62] sm:$0xff]
        %v643 = vld [vmem:[#allocation2 + $0x6a] sm:$0xff]
        %v644 = vld [vmem:[#allocation2 + $0x7a] sm:$0xff]
        %v645 = vld [vmem:[#allocation2 + $0x82] sm:$0xff]
        %v646 = vld [vmem:[#allocation2 + $0x92] sm:$0xff]
        %v647 = vld [vmem:[#allocation2 + $0x9a] sm:$0xff]
        %v648 = vld [vmem:[#allocation2 + $0xaa] sm:$0xff]
        %v649 = vld [vmem:[#allocation2 + $0xb2] sm:$0xff]
        %v650 = vld [vmem:[#allocation2 + $0xc2] sm:$0xff]
        %v651 = vld [vmem:[#allocation2 + $0xca] sm:$0xff]
        %v652 = vld [vmem:[#allocation2 + $0xda] sm:$0xff]
        %v653 = vld [vmem:[#allocation2 + $0xe2] sm:$0xff]
        %v654 = vld [vmem:[#allocation2 + $0xf2] sm:$0xff]
        %v655 = vld [vmem:[#allocation2 + $0xfa] sm:$0xff]
        %v656 = vld [vmem:[#allocation2 + $0x10a] sm:$0xff]
        %v657 = vld [vmem:[#allocation2 + $0x112] sm:$0xff]
        %v658 = vld [vmem:[#allocation2 + $0x122] sm:$0xff]
        %v659 = vld [vmem:[#allocation2 + $0x12a] sm:$0xff]
        %v660 = vld [vmem:[#allocation2 + $0x13a] sm:$0xff]
        %v661 = vld [vmem:[#allocation2 + $0x142] sm:$0xff]
        %v662 = vld [vmem:[#allocation2 + $0x152] sm:$0xff]
        %v663 = vld [vmem:[#allocation2 + $0x15a] sm:$0xff]
        %v664 = vld [vmem:[#allocation2 + $0x16a] sm:$0xff]
        %v665 = vld [vmem:[#allocation2 + $0x172] sm:$0xff]
        %698 = vrot.lane.b32.xlu0 %v634, 6
        %v699 = vpop.permute.xlu0 %698
        %700 = vrot.lane.b32.xlu0 %v635, 6
        %v701 = vpop.permute.xlu0 %700
        %702 = vrot.lane.b32.xlu0 %v636, 6
        %v703 = vpop.permute.xlu0 %702
        %704 = vrot.lane.b32.xlu0 %v637, 6
        %v705 = vpop.permute.xlu0 %704
        %706 = vrot.lane.b32.xlu0 %v638, 6
        %v707 = vpop.permute.xlu0 %706
        %708 = vrot.lane.b32.xlu0 %v639, 6
        %v709 = vpop.permute.xlu0 %708
        %710 = vrot.lane.b32.xlu0 %v640, 6
        %v711 = vpop.permute.xlu0 %710
        %712 = vrot.lane.b32.xlu0 %v641, 6
        %v713 = vpop.permute.xlu0 %712
        %714 = vrot.lane.b32.xlu0 %v642, 6
        %v715 = vpop.permute.xlu0 %714
        %716 = vrot.lane.b32.xlu0 %v643, 6
        %v717 = vpop.permute.xlu0 %716
        %718 = vrot.lane.b32.xlu0 %v644, 6
        %v719 = vpop.permute.xlu0 %718
        %720 = vrot.lane.b32.xlu0 %v645, 6
        %v721 = vpop.permute.xlu0 %720
        %722 = vrot.lane.b32.xlu0 %v646, 6
        %v723 = vpop.permute.xlu0 %722
        %724 = vrot.lane.b32.xlu0 %v647, 6
        %v725 = vpop.permute.xlu0 %724
        %726 = vrot.lane.b32.xlu0 %v648, 6
        %v727 = vpop.permute.xlu0 %726
        %728 = vrot.lane.b32.xlu0 %v649, 6
        %v729 = vpop.permute.xlu0 %728
        %730 = vrot.lane.b32.xlu0 %v650, 6
        %v731 = vpop.permute.xlu0 %730
        %732 = vrot.lane.b32.xlu0 %v651, 6
        %v733 = vpop.permute.xlu0 %732
        %734 = vrot.lane.b32.xlu0 %v652, 6
        %v735 = vpop.permute.xlu0 %734
        %736 = vrot.lane.b32.xlu0 %v653, 6
        %v737 = vpop.permute.xlu0 %736
        %738 = vrot.lane.b32.xlu0 %v654, 6
        %v739 = vpop.permute.xlu0 %738
        %740 = vrot.lane.b32.xlu0 %v655, 6
        %v741 = vpop.permute.xlu0 %740
        %742 = vrot.lane.b32.xlu0 %v656, 6
        %v743 = vpop.permute.xlu0 %742
        %744 = vrot.lane.b32.xlu0 %v657, 6
        %v745 = vpop.permute.xlu0 %744
        %746 = vrot.lane.b32.xlu0 %v658, 6
        %v747 = vpop.permute.xlu0 %746
        %748 = vrot.lane.b32.xlu0 %v659, 6
        %v749 = vpop.permute.xlu0 %748
        %750 = vrot.lane.b32.xlu0 %v660, 6
        %v751 = vpop.permute.xlu0 %750
        %752 = vrot.lane.b32.xlu0 %v661, 6
        %v753 = vpop.permute.xlu0 %752
        %754 = vrot.lane.b32.xlu0 %v662, 6
        %v755 = vpop.permute.xlu0 %754
        %756 = vrot.lane.b32.xlu0 %v663, 6
        %v757 = vpop.permute.xlu0 %756
        %758 = vrot.lane.b32.xlu0 %v664, 6
        %v759 = vpop.permute.xlu0 %758
        %760 = vrot.lane.b32.xlu0 %v665, 6
        %v761 = vpop.permute.xlu0 %760
        %vm794 = vcmask 72752
        %795 = vst.msk [vmem:[#allocation3] sm:$0xff] %vm794, %v699
        %796 = vst.msk [vmem:[#allocation3 + $0x8] sm:$0xff] %vm794, %v701
        %797 = vst.msk [vmem:[#allocation3 + $0x10] sm:$0xff] %vm794, %v703
        %798 = vst.msk [vmem:[#allocation3 + $0x18] sm:$0xff] %vm794, %v705
        %799 = vst.msk [vmem:[#allocation3 + $0x20] sm:$0xff] %vm794, %v707
        %800 = vst.msk [vmem:[#allocation3 + $0x28] sm:$0xff] %vm794, %v709
        %801 = vst.msk [vmem:[#allocation3 + $0x30] sm:$0xff] %vm794, %v711
        %802 = vst.msk [vmem:[#allocation3 + $0x38] sm:$0xff] %vm794, %v713
        %803 = vst.msk [vmem:[#allocation3 + $0x40] sm:$0xff] %vm794, %v715
        %804 = vst.msk [vmem:[#allocation3 + $0x48] sm:$0xff] %vm794, %v717
        %805 = vst.msk [vmem:[#allocation3 + $0x50] sm:$0xff] %vm794, %v719
        %806 = vst.msk [vmem:[#allocation3 + $0x58] sm:$0xff] %vm794, %v721
        %807 = vst.msk [vmem:[#allocation3 + $0x60] sm:$0xff] %vm794, %v723
        %808 = vst.msk [vmem:[#allocation3 + $0x68] sm:$0xff] %vm794, %v725
        %809 = vst.msk [vmem:[#allocation3 + $0x70] sm:$0xff] %vm794, %v727
        %810 = vst.msk [vmem:[#allocation3 + $0x78] sm:$0xff] %vm794, %v729
        %811 = vst.msk [vmem:[#allocation3 + $0x80] sm:$0xff] %vm794, %v731
        %812 = vst.msk [vmem:[#allocation3 + $0x88] sm:$0xff] %vm794, %v733
        %813 = vst.msk [vmem:[#allocation3 + $0x90] sm:$0xff] %vm794, %v735
        %814 = vst.msk [vmem:[#allocation3 + $0x98] sm:$0xff] %vm794, %v737
        %815 = vst.msk [vmem:[#allocation3 + $0xa0] sm:$0xff] %vm794, %v739
        %816 = vst.msk [vmem:[#allocation3 + $0xa8] sm:$0xff] %vm794, %v741
        %817 = vst.msk [vmem:[#allocation3 + $0xb0] sm:$0xff] %vm794, %v743
        %818 = vst.msk [vmem:[#allocation3 + $0xb8] sm:$0xff] %vm794, %v745
        %819 = vst.msk [vmem:[#allocation3 + $0xc0] sm:$0xff] %vm794, %v747
        %820 = vst.msk [vmem:[#allocation3 + $0xc8] sm:$0xff] %vm794, %v749
        %821 = vst.msk [vmem:[#allocation3 + $0xd0] sm:$0xff] %vm794, %v751
        %822 = vst.msk [vmem:[#allocation3 + $0xd8] sm:$0xff] %vm794, %v753
        %823 = vst.msk [vmem:[#allocation3 + $0xe0] sm:$0xff] %vm794, %v755
        %824 = vst.msk [vmem:[#allocation3 + $0xe8] sm:$0xff] %vm794, %v757
        %825 = vst.msk [vmem:[#allocation3 + $0xf0] sm:$0xff] %vm794, %v759
        %826 = vst.msk [vmem:[#allocation3 + $0xf8] sm:$0xff] %vm794, %v761
        %v827 = vld [vmem:[%s311] sm:$0xff]
        %v828 = vld [vmem:[%s311 + $0x8] sm:$0xff]
        %v829 = vld [vmem:[%s311 + $0x18] sm:$0xff]
        %v830 = vld [vmem:[%s311 + $0x20] sm:$0xff]
        %v831 = vld [vmem:[%s311 + $0x30] sm:$0xff]
        %v832 = vld [vmem:[%s311 + $0x38] sm:$0xff]
        %v833 = vld [vmem:[%s311 + $0x48] sm:$0xff]
        %v834 = vld [vmem:[%s311 + $0x50] sm:$0xff]
        %v835 = vld [vmem:[%s311 + $0x60] sm:$0xff]
        %v836 = vld [vmem:[%s311 + $0x68] sm:$0xff]
        %v837 = vld [vmem:[%s311 + $0x78] sm:$0xff]
        %v838 = vld [vmem:[%s311 + $0x80] sm:$0xff]
        %v839 = vld [vmem:[%s311 + $0x90] sm:$0xff]
        %v840 = vld [vmem:[%s311 + $0x98] sm:$0xff]
        %v841 = vld [vmem:[%s311 + $0xa8] sm:$0xff]
        %v842 = vld [vmem:[%s311 + $0xb0] sm:$0xff]
        %v843 = vld [vmem:[%s311 + $0xc0] sm:$0xff]
        %v844 = vld [vmem:[%s311 + $0xc8] sm:$0xff]
        %v845 = vld [vmem:[%s311 + $0xd8] sm:$0xff]
        %v846 = vld [vmem:[%s311 + $0xe0] sm:$0xff]
        %v847 = vld [vmem:[%s311 + $0xf0] sm:$0xff]
        %v848 = vld [vmem:[%s311 + $0xf8] sm:$0xff]
        %v849 = vld [vmem:[%s311 + $0x108] sm:$0xff]
        %v850 = vld [vmem:[%s311 + $0x110] sm:$0xff]
        %v851 = vld [vmem:[%s311 + $0x120] sm:$0xff]
        %v852 = vld [vmem:[%s311 + $0x128] sm:$0xff]
        %v853 = vld [vmem:[%s311 + $0x138] sm:$0xff]
        %v854 = vld [vmem:[%s311 + $0x140] sm:$0xff]
        %v855 = vld [vmem:[%s311 + $0x150] sm:$0xff]
        %v856 = vld [vmem:[%s311 + $0x158] sm:$0xff]
        %v857 = vld [vmem:[%s311 + $0x168] sm:$0xff]
        %v858 = vld [vmem:[%s311 + $0x170] sm:$0xff]
        %891 = vrot.lane.b32.xlu0 %v827, 9
        %v892 = vpop.permute.xlu0 %891
        %893 = vrot.lane.b32.xlu0 %v828, 9
        %v894 = vpop.permute.xlu0 %893
        %895 = vrot.lane.b32.xlu0 %v829, 9
        %v896 = vpop.permute.xlu0 %895
        %897 = vrot.lane.b32.xlu0 %v830, 9
        %v898 = vpop.permute.xlu0 %897
        %899 = vrot.lane.b32.xlu0 %v831, 9
        %v900 = vpop.permute.xlu0 %899
        %901 = vrot.lane.b32.xlu0 %v832, 9
        %v902 = vpop.permute.xlu0 %901
        %903 = vrot.lane.b32.xlu0 %v833, 9
        %v904 = vpop.permute.xlu0 %903
        %905 = vrot.lane.b32.xlu0 %v834, 9
        %v906 = vpop.permute.xlu0 %905
        %907 = vrot.lane.b32.xlu0 %v835, 9
        %v908 = vpop.permute.xlu0 %907
        %909 = vrot.lane.b32.xlu0 %v836, 9
        %v910 = vpop.permute.xlu0 %909
        %911 = vrot.lane.b32.xlu0 %v837, 9
        %v912 = vpop.permute.xlu0 %911
        %913 = vrot.lane.b32.xlu0 %v838, 9
        %v914 = vpop.permute.xlu0 %913
        %915 = vrot.lane.b32.xlu0 %v839, 9
        %v916 = vpop.permute.xlu0 %915
        %917 = vrot.lane.b32.xlu0 %v840, 9
        %v918 = vpop.permute.xlu0 %917
        %919 = vrot.lane.b32.xlu0 %v841, 9
        %v920 = vpop.permute.xlu0 %919
        %921 = vrot.lane.b32.xlu0 %v842, 9
        %v922 = vpop.permute.xlu0 %921
        %923 = vrot.lane.b32.xlu0 %v843, 9
        %v924 = vpop.permute.xlu0 %923
        %925 = vrot.lane.b32.xlu0 %v844, 9
        %v926 = vpop.permute.xlu0 %925
        %927 = vrot.lane.b32.xlu0 %v845, 9
        %v928 = vpop.permute.xlu0 %927
        %929 = vrot.lane.b32.xlu0 %v846, 9
        %v930 = vpop.permute.xlu0 %929
        %931 = vrot.lane.b32.xlu0 %v847, 9
        %v932 = vpop.permute.xlu0 %931
        %933 = vrot.lane.b32.xlu0 %v848, 9
        %v934 = vpop.permute.xlu0 %933
        %935 = vrot.lane.b32.xlu0 %v849, 9
        %v936 = vpop.permute.xlu0 %935
        %937 = vrot.lane.b32.xlu0 %v850, 9
        %v938 = vpop.permute.xlu0 %937
        %939 = vrot.lane.b32.xlu0 %v851, 9
        %v940 = vpop.permute.xlu0 %939
        %941 = vrot.lane.b32.xlu0 %v852, 9
        %v942 = vpop.permute.xlu0 %941
        %943 = vrot.lane.b32.xlu0 %v853, 9
        %v944 = vpop.permute.xlu0 %943
        %945 = vrot.lane.b32.xlu0 %v854, 9
        %v946 = vpop.permute.xlu0 %945
        %947 = vrot.lane.b32.xlu0 %v855, 9
        %v948 = vpop.permute.xlu0 %947
        %949 = vrot.lane.b32.xlu0 %v856, 9
        %v950 = vpop.permute.xlu0 %949
        %951 = vrot.lane.b32.xlu0 %v857, 9
        %v952 = vpop.permute.xlu0 %951
        %953 = vrot.lane.b32.xlu0 %v858, 9
        %v954 = vpop.permute.xlu0 %953
        %vm987 = vcmask 97352
        %988 = vst.msk [vmem:[#allocation3] sm:$0xff] %vm987, %v892
        %989 = vst.msk [vmem:[#allocation3 + $0x8] sm:$0xff] %vm987, %v894
        %990 = vst.msk [vmem:[#allocation3 + $0x10] sm:$0xff] %vm987, %v896
        %991 = vst.msk [vmem:[#allocation3 + $0x18] sm:$0xff] %vm987, %v898
        %992 = vst.msk [vmem:[#allocation3 + $0x20] sm:$0xff] %vm987, %v900
        %993 = vst.msk [vmem:[#allocation3 + $0x28] sm:$0xff] %vm987, %v902
        %994 = vst.msk [vmem:[#allocation3 + $0x30] sm:$0xff] %vm987, %v904
        %995 = vst.msk [vmem:[#allocation3 + $0x38] sm:$0xff] %vm987, %v906
        %996 = vst.msk [vmem:[#allocation3 + $0x40] sm:$0xff] %vm987, %v908
        %997 = vst.msk [vmem:[#allocation3 + $0x48] sm:$0xff] %vm987, %v910
        %998 = vst.msk [vmem:[#allocation3 + $0x50] sm:$0xff] %vm987, %v912
        %999 = vst.msk [vmem:[#allocation3 + $0x58] sm:$0xff] %vm987, %v914
        %1000 = vst.msk [vmem:[#allocation3 + $0x60] sm:$0xff] %vm987, %v916
        %1001 = vst.msk [vmem:[#allocation3 + $0x68] sm:$0xff] %vm987, %v918
        %1002 = vst.msk [vmem:[#allocation3 + $0x70] sm:$0xff] %vm987, %v920
        %1003 = vst.msk [vmem:[#allocation3 + $0x78] sm:$0xff] %vm987, %v922
        %1004 = vst.msk [vmem:[#allocation3 + $0x80] sm:$0xff] %vm987, %v924
        %1005 = vst.msk [vmem:[#allocation3 + $0x88] sm:$0xff] %vm987, %v926
        %1006 = vst.msk [vmem:[#allocation3 + $0x90] sm:$0xff] %vm987, %v928
        %1007 = vst.msk [vmem:[#allocation3 + $0x98] sm:$0xff] %vm987, %v930
        %1008 = vst.msk [vmem:[#allocation3 + $0xa0] sm:$0xff] %vm987, %v932
        %1009 = vst.msk [vmem:[#allocation3 + $0xa8] sm:$0xff] %vm987, %v934
        %1010 = vst.msk [vmem:[#allocation3 + $0xb0] sm:$0xff] %vm987, %v936
        %1011 = vst.msk [vmem:[#allocation3 + $0xb8] sm:$0xff] %vm987, %v938
        %1012 = vst.msk [vmem:[#allocation3 + $0xc0] sm:$0xff] %vm987, %v940
        %1013 = vst.msk [vmem:[#allocation3 + $0xc8] sm:$0xff] %vm987, %v942
        %1014 = vst.msk [vmem:[#allocation3 + $0xd0] sm:$0xff] %vm987, %v944
        %1015 = vst.msk [vmem:[#allocation3 + $0xd8] sm:$0xff] %vm987, %v946
        %1016 = vst.msk [vmem:[#allocation3 + $0xe0] sm:$0xff] %vm987, %v948
        %1017 = vst.msk [vmem:[#allocation3 + $0xe8] sm:$0xff] %vm987, %v950
        %1018 = vst.msk [vmem:[#allocation3 + $0xf0] sm:$0xff] %vm987, %v952
        %1019 = vst.msk [vmem:[#allocation3 + $0xf8] sm:$0xff] %vm987, %v954
        %v1020 = vld [vmem:[%s311 + $0x1] sm:$0xff]
        %v1021 = vld [vmem:[%s311 + $0x9] sm:$0xff]
        %v1022 = vld [vmem:[%s311 + $0x19] sm:$0xff]
        %v1023 = vld [vmem:[%s311 + $0x21] sm:$0xff]
        %v1024 = vld [vmem:[%s311 + $0x31] sm:$0xff]
        %v1025 = vld [vmem:[%s311 + $0x39] sm:$0xff]
        %v1026 = vld [vmem:[%s311 + $0x49] sm:$0xff]
        %v1027 = vld [vmem:[%s311 + $0x51] sm:$0xff]
        %v1028 = vld [vmem:[%s311 + $0x61] sm:$0xff]
        %v1029 = vld [vmem:[%s311 + $0x69] sm:$0xff]
        %v1030 = vld [vmem:[%s311 + $0x79] sm:$0xff]
        %v1031 = vld [vmem:[%s311 + $0x81] sm:$0xff]
        %v1032 = vld [vmem:[%s311 + $0x91] sm:$0xff]
        %v1033 = vld [vmem:[%s311 + $0x99] sm:$0xff]
        %v1034 = vld [vmem:[%s311 + $0xa9] sm:$0xff]
        %v1035 = vld [vmem:[%s311 + $0xb1] sm:$0xff]
        %v1036 = vld [vmem:[%s311 + $0xc1] sm:$0xff]
        %v1037 = vld [vmem:[%s311 + $0xc9] sm:$0xff]
        %v1038 = vld [vmem:[%s311 + $0xd9] sm:$0xff]
        %v1039 = vld [vmem:[%s311 + $0xe1] sm:$0xff]
        %v1040 = vld [vmem:[%s311 + $0xf1] sm:$0xff]
        %v1041 = vld [vmem:[%s311 + $0xf9] sm:$0xff]
        %v1042 = vld [vmem:[%s311 + $0x109] sm:$0xff]
        %v1043 = vld [vmem:[%s311 + $0x111] sm:$0xff]
        %v1044 = vld [vmem:[%s311 + $0x121] sm:$0xff]
        %v1045 = vld [vmem:[%s311 + $0x129] sm:$0xff]
        %v1046 = vld [vmem:[%s311 + $0x139] sm:$0xff]
        %v1047 = vld [vmem:[%s311 + $0x141] sm:$0xff]
        %v1048 = vld [vmem:[%s311 + $0x151] sm:$0xff]
        %v1049 = vld [vmem:[%s311 + $0x159] sm:$0xff]
        %v1050 = vld [vmem:[%s311 + $0x169] sm:$0xff]
        %v1051 = vld [vmem:[%s311 + $0x171] sm:$0xff]
        %1084 = vrot.lane.b32.xlu0 %v1020, 12
        %v1085 = vpop.permute.xlu0 %1084
        %1086 = vrot.lane.b32.xlu0 %v1021, 12
        %v1087 = vpop.permute.xlu0 %1086
        %1088 = vrot.lane.b32.xlu0 %v1022, 12
        %v1089 = vpop.permute.xlu0 %1088
        %1090 = vrot.lane.b32.xlu0 %v1023, 12
        %v1091 = vpop.permute.xlu0 %1090
        %1092 = vrot.lane.b32.xlu0 %v1024, 12
        %v1093 = vpop.permute.xlu0 %1092
        %1094 = vrot.lane.b32.xlu0 %v1025, 12
        %v1095 = vpop.permute.xlu0 %1094
        %1096 = vrot.lane.b32.xlu0 %v1026, 12
        %v1097 = vpop.permute.xlu0 %1096
        %1098 = vrot.lane.b32.xlu0 %v1027, 12
        %v1099 = vpop.permute.xlu0 %1098
        %1100 = vrot.lane.b32.xlu0 %v1028, 12
        %v1101 = vpop.permute.xlu0 %1100
        %1102 = vrot.lane.b32.xlu0 %v1029, 12
        %v1103 = vpop.permute.xlu0 %1102
        %1104 = vrot.lane.b32.xlu0 %v1030, 12
        %v1105 = vpop.permute.xlu0 %1104
        %1106 = vrot.lane.b32.xlu0 %v1031, 12
        %v1107 = vpop.permute.xlu0 %1106
        %1108 = vrot.lane.b32.xlu0 %v1032, 12
        %v1109 = vpop.permute.xlu0 %1108
        %1110 = vrot.lane.b32.xlu0 %v1033, 12
        %v1111 = vpop.permute.xlu0 %1110
        %1112 = vrot.lane.b32.xlu0 %v1034, 12
        %v1113 = vpop.permute.xlu0 %1112
        %1114 = vrot.lane.b32.xlu0 %v1035, 12
        %v1115 = vpop.permute.xlu0 %1114
        %1116 = vrot.lane.b32.xlu0 %v1036, 12
        %v1117 = vpop.permute.xlu0 %1116
        %1118 = vrot.lane.b32.xlu0 %v1037, 12
        %v1119 = vpop.permute.xlu0 %1118
        %1120 = vrot.lane.b32.xlu0 %v1038, 12
        %v1121 = vpop.permute.xlu0 %1120
        %1122 = vrot.lane.b32.xlu0 %v1039, 12
        %v1123 = vpop.permute.xlu0 %1122
        %1124 = vrot.lane.b32.xlu0 %v1040, 12
        %v1125 = vpop.permute.xlu0 %1124
        %1126 = vrot.lane.b32.xlu0 %v1041, 12
        %v1127 = vpop.permute.xlu0 %1126
        %1128 = vrot.lane.b32.xlu0 %v1042, 12
        %v1129 = vpop.permute.xlu0 %1128
        %1130 = vrot.lane.b32.xlu0 %v1043, 12
        %v1131 = vpop.permute.xlu0 %1130
        %1132 = vrot.lane.b32.xlu0 %v1044, 12
        %v1133 = vpop.permute.xlu0 %1132
        %1134 = vrot.lane.b32.xlu0 %v1045, 12
        %v1135 = vpop.permute.xlu0 %1134
        %1136 = vrot.lane.b32.xlu0 %v1046, 12
        %v1137 = vpop.permute.xlu0 %1136
        %1138 = vrot.lane.b32.xlu0 %v1047, 12
        %v1139 = vpop.permute.xlu0 %1138
        %1140 = vrot.lane.b32.xlu0 %v1048, 12
        %v1141 = vpop.permute.xlu0 %1140
        %1142 = vrot.lane.b32.xlu0 %v1049, 12
        %v1143 = vpop.permute.xlu0 %1142
        %1144 = vrot.lane.b32.xlu0 %v1050, 12
        %v1145 = vpop.permute.xlu0 %1144
        %1146 = vrot.lane.b32.xlu0 %v1051, 12
        %v1147 = vpop.permute.xlu0 %1146
        %vm1180 = vcmask 121952
        %1181 = vst.msk [vmem:[#allocation3] sm:$0xff] %vm1180, %v1085
        %1182 = vst.msk [vmem:[#allocation3 + $0x8] sm:$0xff] %vm1180, %v1087
        %1183 = vst.msk [vmem:[#allocation3 + $0x10] sm:$0xff] %vm1180, %v1089
        %1184 = vst.msk [vmem:[#allocation3 + $0x18] sm:$0xff] %vm1180, %v1091
        %1185 = vst.msk [vmem:[#allocation3 + $0x20] sm:$0xff] %vm1180, %v1093
        %1186 = vst.msk [vmem:[#allocation3 + $0x28] sm:$0xff] %vm1180, %v1095
        %1187 = vst.msk [vmem:[#allocation3 + $0x30] sm:$0xff] %vm1180, %v1097
        %1188 = vst.msk [vmem:[#allocation3 + $0x38] sm:$0xff] %vm1180, %v1099
        %1189 = vst.msk [vmem:[#allocation3 + $0x40] sm:$0xff] %vm1180, %v1101
        %1190 = vst.msk [vmem:[#allocation3 + $0x48] sm:$0xff] %vm1180, %v1103
        %1191 = vst.msk [vmem:[#allocation3 + $0x50] sm:$0xff] %vm1180, %v1105
        %1192 = vst.msk [vmem:[#allocation3 + $0x58] sm:$0xff] %vm1180, %v1107
        %1193 = vst.msk [vmem:[#allocation3 + $0x60] sm:$0xff] %vm1180, %v1109
        %1194 = vst.msk [vmem:[#allocation3 + $0x68] sm:$0xff] %vm1180, %v1111
        %1195 = vst.msk [vmem:[#allocation3 + $0x70] sm:$0xff] %vm1180, %v1113
        %1196 = vst.msk [vmem:[#allocation3 + $0x78] sm:$0xff] %vm1180, %v1115
        %1197 = vst.msk [vmem:[#allocation3 + $0x80] sm:$0xff] %vm1180, %v1117
        %1198 = vst.msk [vmem:[#allocation3 + $0x88] sm:$0xff] %vm1180, %v1119
        %1199 = vst.msk [vmem:[#allocation3 + $0x90] sm:$0xff] %vm1180, %v1121
        %1200 = vst.msk [vmem:[#allocation3 + $0x98] sm:$0xff] %vm1180, %v1123
        %1201 = vst.msk [vmem:[#allocation3 + $0xa0] sm:$0xff] %vm1180, %v1125
        %1202 = vst.msk [vmem:[#allocation3 + $0xa8] sm:$0xff] %vm1180, %v1127
        %1203 = vst.msk [vmem:[#allocation3 + $0xb0] sm:$0xff] %vm1180, %v1129
        %1204 = vst.msk [vmem:[#allocation3 + $0xb8] sm:$0xff] %vm1180, %v1131
        %1205 = vst.msk [vmem:[#allocation3 + $0xc0] sm:$0xff] %vm1180, %v1133
        %1206 = vst.msk [vmem:[#allocation3 + $0xc8] sm:$0xff] %vm1180, %v1135
        %1207 = vst.msk [vmem:[#allocation3 + $0xd0] sm:$0xff] %vm1180, %v1137
        %1208 = vst.msk [vmem:[#allocation3 + $0xd8] sm:$0xff] %vm1180, %v1139
        %1209 = vst.msk [vmem:[#allocation3 + $0xe0] sm:$0xff] %vm1180, %v1141
        %1210 = vst.msk [vmem:[#allocation3 + $0xe8] sm:$0xff] %vm1180, %v1143
        %1211 = vst.msk [vmem:[#allocation3 + $0xf0] sm:$0xff] %vm1180, %v1145
        %1212 = vst.msk [vmem:[#allocation3 + $0xf8] sm:$0xff] %vm1180, %v1147
        %v1213 = vld [vmem:[%s311 + $0x2] sm:$0xff]
        %v1214 = vld [vmem:[%s311 + $0xa] sm:$0xff]
        %v1215 = vld [vmem:[%s311 + $0x1a] sm:$0xff]
        %v1216 = vld [vmem:[%s311 + $0x22] sm:$0xff]
        %v1217 = vld [vmem:[%s311 + $0x32] sm:$0xff]
        %v1218 = vld [vmem:[%s311 + $0x3a] sm:$0xff]
        %v1219 = vld [vmem:[%s311 + $0x4a] sm:$0xff]
        %v1220 = vld [vmem:[%s311 + $0x52] sm:$0xff]
        %v1221 = vld [vmem:[%s311 + $0x62] sm:$0xff]
        %v1222 = vld [vmem:[%s311 + $0x6a] sm:$0xff]
        %v1223 = vld [vmem:[%s311 + $0x7a] sm:$0xff]
        %v1224 = vld [vmem:[%s311 + $0x82] sm:$0xff]
        %v1225 = vld [vmem:[%s311 + $0x92] sm:$0xff]
        %v1226 = vld [vmem:[%s311 + $0x9a] sm:$0xff]
        %v1227 = vld [vmem:[%s311 + $0xaa] sm:$0xff]
        %v1228 = vld [vmem:[%s311 + $0xb2] sm:$0xff]
        %v1229 = vld [vmem:[%s311 + $0xc2] sm:$0xff]
        %v1230 = vld [vmem:[%s311 + $0xca] sm:$0xff]
        %v1231 = vld [vmem:[%s311 + $0xda] sm:$0xff]
        %v1232 = vld [vmem:[%s311 + $0xe2] sm:$0xff]
        %v1233 = vld [vmem:[%s311 + $0xf2] sm:$0xff]
        %v1234 = vld [vmem:[%s311 + $0xfa] sm:$0xff]
        %v1235 = vld [vmem:[%s311 + $0x10a] sm:$0xff]
        %v1236 = vld [vmem:[%s311 + $0x112] sm:$0xff]
        %v1237 = vld [vmem:[%s311 + $0x122] sm:$0xff]
        %v1238 = vld [vmem:[%s311 + $0x12a] sm:$0xff]
        %v1239 = vld [vmem:[%s311 + $0x13a] sm:$0xff]
        %v1240 = vld [vmem:[%s311 + $0x142] sm:$0xff]
        %v1241 = vld [vmem:[%s311 + $0x152] sm:$0xff]
        %v1242 = vld [vmem:[%s311 + $0x15a] sm:$0xff]
        %v1243 = vld [vmem:[%s311 + $0x16a] sm:$0xff]
        %v1244 = vld [vmem:[%s311 + $0x172] sm:$0xff]
        %1277 = vrot.lane.b32.xlu0 %v1213, 15
        %v1278 = vpop.permute.xlu0 %1277
        %1279 = vrot.lane.b32.xlu0 %v1214, 15
        %v1280 = vpop.permute.xlu0 %1279
        %1281 = vrot.lane.b32.xlu0 %v1215, 15
        %v1282 = vpop.permute.xlu0 %1281
        %1283 = vrot.lane.b32.xlu0 %v1216, 15
        %v1284 = vpop.permute.xlu0 %1283
        %1285 = vrot.lane.b32.xlu0 %v1217, 15
        %v1286 = vpop.permute.xlu0 %1285
        %1287 = vrot.lane.b32.xlu0 %v1218, 15
        %v1288 = vpop.permute.xlu0 %1287
        %1289 = vrot.lane.b32.xlu0 %v1219, 15
        %v1290 = vpop.permute.xlu0 %1289
        %1291 = vrot.lane.b32.xlu0 %v1220, 15
        %v1292 = vpop.permute.xlu0 %1291
        %1293 = vrot.lane.b32.xlu0 %v1221, 15
        %v1294 = vpop.permute.xlu0 %1293
        %1295 = vrot.lane.b32.xlu0 %v1222, 15
        %v1296 = vpop.permute.xlu0 %1295
        %1297 = vrot.lane.b32.xlu0 %v1223, 15
        %v1298 = vpop.permute.xlu0 %1297
        %1299 = vrot.lane.b32.xlu0 %v1224, 15
        %v1300 = vpop.permute.xlu0 %1299
        %1301 = vrot.lane.b32.xlu0 %v1225, 15
        %v1302 = vpop.permute.xlu0 %1301
        %1303 = vrot.lane.b32.xlu0 %v1226, 15
        %v1304 = vpop.permute.xlu0 %1303
        %1305 = vrot.lane.b32.xlu0 %v1227, 15
        %v1306 = vpop.permute.xlu0 %1305
        %1307 = vrot.lane.b32.xlu0 %v1228, 15
        %v1308 = vpop.permute.xlu0 %1307
        %1309 = vrot.lane.b32.xlu0 %v1229, 15
        %v1310 = vpop.permute.xlu0 %1309
        %1311 = vrot.lane.b32.xlu0 %v1230, 15
        %v1312 = vpop.permute.xlu0 %1311
        %1313 = vrot.lane.b32.xlu0 %v1231, 15
        %v1314 = vpop.permute.xlu0 %1313
        %1315 = vrot.lane.b32.xlu0 %v1232, 15
        %v1316 = vpop.permute.xlu0 %1315
        %1317 = vrot.lane.b32.xlu0 %v1233, 15
        %v1318 = vpop.permute.xlu0 %1317
        %1319 = vrot.lane.b32.xlu0 %v1234, 15
        %v1320 = vpop.permute.xlu0 %1319
        %1321 = vrot.lane.b32.xlu0 %v1235, 15
        %v1322 = vpop.permute.xlu0 %1321
        %1323 = vrot.lane.b32.xlu0 %v1236, 15
        %v1324 = vpop.permute.xlu0 %1323
        %1325 = vrot.lane.b32.xlu0 %v1237, 15
        %v1326 = vpop.permute.xlu0 %1325
        %1327 = vrot.lane.b32.xlu0 %v1238, 15
        %v1328 = vpop.permute.xlu0 %1327
        %1329 = vrot.lane.b32.xlu0 %v1239, 15
        %v1330 = vpop.permute.xlu0 %1329
        %1331 = vrot.lane.b32.xlu0 %v1240, 15
        %v1332 = vpop.permute.xlu0 %1331
        %1333 = vrot.lane.b32.xlu0 %v1241, 15
        %v1334 = vpop.permute.xlu0 %1333
        %1335 = vrot.lane.b32.xlu0 %v1242, 15
        %v1336 = vpop.permute.xlu0 %1335
        %1337 = vrot.lane.b32.xlu0 %v1243, 15
        %v1338 = vpop.permute.xlu0 %1337
        %1339 = vrot.lane.b32.xlu0 %v1244, 15
        %v1340 = vpop.permute.xlu0 %1339
        %vm1373 = vcmask 146552
        %1374 = vst.msk [vmem:[#allocation3] sm:$0xff] %vm1373, %v1278
        %1375 = vst.msk [vmem:[#allocation3 + $0x8] sm:$0xff] %vm1373, %v1280
        %1376 = vst.msk [vmem:[#allocation3 + $0x10] sm:$0xff] %vm1373, %v1282
        %1377 = vst.msk [vmem:[#allocation3 + $0x18] sm:$0xff] %vm1373, %v1284
        %1378 = vst.msk [vmem:[#allocation3 + $0x20] sm:$0xff] %vm1373, %v1286
        %1379 = vst.msk [vmem:[#allocation3 + $0x28] sm:$0xff] %vm1373, %v1288
        %1380 = vst.msk [vmem:[#allocation3 + $0x30] sm:$0xff] %vm1373, %v1290
        %1381 = vst.msk [vmem:[#allocation3 + $0x38] sm:$0xff] %vm1373, %v1292
        %1382 = vst.msk [vmem:[#allocation3 + $0x40] sm:$0xff] %vm1373, %v1294
        %1383 = vst.msk [vmem:[#allocation3 + $0x48] sm:$0xff] %vm1373, %v1296
        %1384 = vst.msk [vmem:[#allocation3 + $0x50] sm:$0xff] %vm1373, %v1298
        %1385 = vst.msk [vmem:[#allocation3 + $0x58] sm:$0xff] %vm1373, %v1300
        %1386 = vst.msk [vmem:[#allocation3 + $0x60] sm:$0xff] %vm1373, %v1302
        %1387 = vst.msk [vmem:[#allocation3 + $0x68] sm:$0xff] %vm1373, %v1304
        %1388 = vst.msk [vmem:[#allocation3 + $0x70] sm:$0xff] %vm1373, %v1306
        %1389 = vst.msk [vmem:[#allocation3 + $0x78] sm:$0xff] %vm1373, %v1308
        %1390 = vst.msk [vmem:[#allocation3 + $0x80] sm:$0xff] %vm1373, %v1310
        %1391 = vst.msk [vmem:[#allocation3 + $0x88] sm:$0xff] %vm1373, %v1312
        %1392 = vst.msk [vmem:[#allocation3 + $0x90] sm:$0xff] %vm1373, %v1314
        %1393 = vst.msk [vmem:[#allocation3 + $0x98] sm:$0xff] %vm1373, %v1316
        %1394 = vst.msk [vmem:[#allocation3 + $0xa0] sm:$0xff] %vm1373, %v1318
        %1395 = vst.msk [vmem:[#allocation3 + $0xa8] sm:$0xff] %vm1373, %v1320
        %1396 = vst.msk [vmem:[#allocation3 + $0xb0] sm:$0xff] %vm1373, %v1322
        %1397 = vst.msk [vmem:[#allocation3 + $0xb8] sm:$0xff] %vm1373, %v1324
        %1398 = vst.msk [vmem:[#allocation3 + $0xc0] sm:$0xff] %vm1373, %v1326
        %1399 = vst.msk [vmem:[#allocation3 + $0xc8] sm:$0xff] %vm1373, %v1328
        %1400 = vst.msk [vmem:[#allocation3 + $0xd0] sm:$0xff] %vm1373, %v1330
        %1401 = vst.msk [vmem:[#allocation3 + $0xd8] sm:$0xff] %vm1373, %v1332
        %1402 = vst.msk [vmem:[#allocation3 + $0xe0] sm:$0xff] %vm1373, %v1334
        %1403 = vst.msk [vmem:[#allocation3 + $0xe8] sm:$0xff] %vm1373, %v1336
        %1404 = vst.msk [vmem:[#allocation3 + $0xf0] sm:$0xff] %vm1373, %v1338
        %1405 = vst.msk [vmem:[#allocation3 + $0xf8] sm:$0xff] %vm1373, %v1340
        %s1406 = scalar_lea.vmem [#allocation2], 48
        %v1407 = vld [vmem:[%s1406] sm:$0xff]
        %v1408 = vld [vmem:[%s1406 + $0x8] sm:$0xff]
        %v1409 = vld [vmem:[%s1406 + $0x18] sm:$0xff]
        %v1410 = vld [vmem:[%s1406 + $0x20] sm:$0xff]
        %v1411 = vld [vmem:[%s1406 + $0x30] sm:$0xff]
        %v1412 = vld [vmem:[%s1406 + $0x38] sm:$0xff]
        %v1413 = vld [vmem:[%s1406 + $0x48] sm:$0xff]
        %v1414 = vld [vmem:[%s1406 + $0x50] sm:$0xff]
        %v1415 = vld [vmem:[%s1406 + $0x60] sm:$0xff]
        %v1416 = vld [vmem:[%s1406 + $0x68] sm:$0xff]
        %v1417 = vld [vmem:[%s1406 + $0x78] sm:$0xff]
        %v1418 = vld [vmem:[%s1406 + $0x80] sm:$0xff]
        %v1419 = vld [vmem:[%s1406 + $0x90] sm:$0xff]
        %v1420 = vld [vmem:[%s1406 + $0x98] sm:$0xff]
        %v1421 = vld [vmem:[%s1406 + $0xa8] sm:$0xff]
        %v1422 = vld [vmem:[%s1406 + $0xb0] sm:$0xff]
        %v1423 = vld [vmem:[%s1406 + $0xc0] sm:$0xff]
        %v1424 = vld [vmem:[%s1406 + $0xc8] sm:$0xff]
        %v1425 = vld [vmem:[%s1406 + $0xd8] sm:$0xff]
        %v1426 = vld [vmem:[%s1406 + $0xe0] sm:$0xff]
        %v1427 = vld [vmem:[%s1406 + $0xf0] sm:$0xff]
        %v1428 = vld [vmem:[%s1406 + $0xf8] sm:$0xff]
        %v1429 = vld [vmem:[%s1406 + $0x108] sm:$0xff]
        %v1430 = vld [vmem:[%s1406 + $0x110] sm:$0xff]
        %v1431 = vld [vmem:[%s1406 + $0x120] sm:$0xff]
        %v1432 = vld [vmem:[%s1406 + $0x128] sm:$0xff]
        %v1433 = vld [vmem:[%s1406 + $0x138] sm:$0xff]
        %v1434 = vld [vmem:[%s1406 + $0x140] sm:$0xff]
        %v1435 = vld [vmem:[%s1406 + $0x150] sm:$0xff]
        %v1436 = vld [vmem:[%s1406 + $0x158] sm:$0xff]
        %v1437 = vld [vmem:[%s1406 + $0x168] sm:$0xff]
        %v1438 = vld [vmem:[%s1406 + $0x170] sm:$0xff]
        %1471 = vrot.lane.b32.xlu0 %v1407, 18
        %v1472 = vpop.permute.xlu0 %1471
        %1473 = vrot.lane.b32.xlu0 %v1408, 18
        %v1474 = vpop.permute.xlu0 %1473
        %1475 = vrot.lane.b32.xlu0 %v1409, 18
        %v1476 = vpop.permute.xlu0 %1475
        %1477 = vrot.lane.b32.xlu0 %v1410, 18
        %v1478 = vpop.permute.xlu0 %1477
        %1479 = vrot.lane.b32.xlu0 %v1411, 18
        %v1480 = vpop.permute.xlu0 %1479
        %1481 = vrot.lane.b32.xlu0 %v1412, 18
        %v1482 = vpop.permute.xlu0 %1481
        %1483 = vrot.lane.b32.xlu0 %v1413, 18
        %v1484 = vpop.permute.xlu0 %1483
        %1485 = vrot.lane.b32.xlu0 %v1414, 18
        %v1486 = vpop.permute.xlu0 %1485
        %1487 = vrot.lane.b32.xlu0 %v1415, 18
        %v1488 = vpop.permute.xlu0 %1487
        %1489 = vrot.lane.b32.xlu0 %v1416, 18
        %v1490 = vpop.permute.xlu0 %1489
        %1491 = vrot.lane.b32.xlu0 %v1417, 18
        %v1492 = vpop.permute.xlu0 %1491
        %1493 = vrot.lane.b32.xlu0 %v1418, 18
        %v1494 = vpop.permute.xlu0 %1493
        %1495 = vrot.lane.b32.xlu0 %v1419, 18
        %v1496 = vpop.permute.xlu0 %1495
        %1497 = vrot.lane.b32.xlu0 %v1420, 18
        %v1498 = vpop.permute.xlu0 %1497
        %1499 = vrot.lane.b32.xlu0 %v1421, 18
        %v1500 = vpop.permute.xlu0 %1499
        %1501 = vrot.lane.b32.xlu0 %v1422, 18
        %v1502 = vpop.permute.xlu0 %1501
        %1503 = vrot.lane.b32.xlu0 %v1423, 18
        %v1504 = vpop.permute.xlu0 %1503
        %1505 = vrot.lane.b32.xlu0 %v1424, 18
        %v1506 = vpop.permute.xlu0 %1505
        %1507 = vrot.lane.b32.xlu0 %v1425, 18
        %v1508 = vpop.permute.xlu0 %1507
        %1509 = vrot.lane.b32.xlu0 %v1426, 18
        %v1510 = vpop.permute.xlu0 %1509
        %1511 = vrot.lane.b32.xlu0 %v1427, 18
        %v1512 = vpop.permute.xlu0 %1511
        %1513 = vrot.lane.b32.xlu0 %v1428, 18
        %v1514 = vpop.permute.xlu0 %1513
        %1515 = vrot.lane.b32.xlu0 %v1429, 18
        %v1516 = vpop.permute.xlu0 %1515
        %1517 = vrot.lane.b32.xlu0 %v1430, 18
        %v1518 = vpop.permute.xlu0 %1517
        %1519 = vrot.lane.b32.xlu0 %v1431, 18
        %v1520 = vpop.permute.xlu0 %1519
        %1521 = vrot.lane.b32.xlu0 %v1432, 18
        %v1522 = vpop.permute.xlu0 %1521
        %1523 = vrot.lane.b32.xlu0 %v1433, 18
        %v1524 = vpop.permute.xlu0 %1523
        %1525 = vrot.lane.b32.xlu0 %v1434, 18
        %v1526 = vpop.permute.xlu0 %1525
        %1527 = vrot.lane.b32.xlu0 %v1435, 18
        %v1528 = vpop.permute.xlu0 %1527
        %1529 = vrot.lane.b32.xlu0 %v1436, 18
        %v1530 = vpop.permute.xlu0 %1529
        %1531 = vrot.lane.b32.xlu0 %v1437, 18
        %v1532 = vpop.permute.xlu0 %1531
        %1533 = vrot.lane.b32.xlu0 %v1438, 18
        %v1534 = vpop.permute.xlu0 %1533
        %vm1567 = vcmask 171152
        %1568 = vst.msk [vmem:[#allocation3] sm:$0xff] %vm1567, %v1472
        %1569 = vst.msk [vmem:[#allocation3 + $0x8] sm:$0xff] %vm1567, %v1474
        %1570 = vst.msk [vmem:[#allocation3 + $0x10] sm:$0xff] %vm1567, %v1476
        %1571 = vst.msk [vmem:[#allocation3 + $0x18] sm:$0xff] %vm1567, %v1478
        %1572 = vst.msk [vmem:[#allocation3 + $0x20] sm:$0xff] %vm1567, %v1480
        %1573 = vst.msk [vmem:[#allocation3 + $0x28] sm:$0xff] %vm1567, %v1482
        %1574 = vst.msk [vmem:[#allocation3 + $0x30] sm:$0xff] %vm1567, %v1484
        %1575 = vst.msk [vmem:[#allocation3 + $0x38] sm:$0xff] %vm1567, %v1486
        %1576 = vst.msk [vmem:[#allocation3 + $0x40] sm:$0xff] %vm1567, %v1488
        %1577 = vst.msk [vmem:[#allocation3 + $0x48] sm:$0xff] %vm1567, %v1490
        %1578 = vst.msk [vmem:[#allocation3 + $0x50] sm:$0xff] %vm1567, %v1492
        %1579 = vst.msk [vmem:[#allocation3 + $0x58] sm:$0xff] %vm1567, %v1494
        %1580 = vst.msk [vmem:[#allocation3 + $0x60] sm:$0xff] %vm1567, %v1496
        %1581 = vst.msk [vmem:[#allocation3 + $0x68] sm:$0xff] %vm1567, %v1498
        %1582 = vst.msk [vmem:[#allocation3 + $0x70] sm:$0xff] %vm1567, %v1500
        %1583 = vst.msk [vmem:[#allocation3 + $0x78] sm:$0xff] %vm1567, %v1502
        %1584 = vst.msk [vmem:[#allocation3 + $0x80] sm:$0xff] %vm1567, %v1504
        %1585 = vst.msk [vmem:[#allocation3 + $0x88] sm:$0xff] %vm1567, %v1506
        %1586 = vst.msk [vmem:[#allocation3 + $0x90] sm:$0xff] %vm1567, %v1508
        %1587 = vst.msk [vmem:[#allocation3 + $0x98] sm:$0xff] %vm1567, %v1510
        %1588 = vst.msk [vmem:[#allocation3 + $0xa0] sm:$0xff] %vm1567, %v1512
        %1589 = vst.msk [vmem:[#allocation3 + $0xa8] sm:$0xff] %vm1567, %v1514
        %1590 = vst.msk [vmem:[#allocation3 + $0xb0] sm:$0xff] %vm1567, %v1516
        %1591 = vst.msk [vmem:[#allocation3 + $0xb8] sm:$0xff] %vm1567, %v1518
        %1592 = vst.msk [vmem:[#allocation3 + $0xc0] sm:$0xff] %vm1567, %v1520
        %1593 = vst.msk [vmem:[#allocation3 + $0xc8] sm:$0xff] %vm1567, %v1522
        %1594 = vst.msk [vmem:[#allocation3 + $0xd0] sm:$0xff] %vm1567, %v1524
        %1595 = vst.msk [vmem:[#allocation3 + $0xd8] sm:$0xff] %vm1567, %v1526
        %1596 = vst.msk [vmem:[#allocation3 + $0xe0] sm:$0xff] %vm1567, %v1528
        %1597 = vst.msk [vmem:[#allocation3 + $0xe8] sm:$0xff] %vm1567, %v1530
        %1598 = vst.msk [vmem:[#allocation3 + $0xf0] sm:$0xff] %vm1567, %v1532
        %1599 = vst.msk [vmem:[#allocation3 + $0xf8] sm:$0xff] %vm1567, %v1534
        %v1600 = vld [vmem:[%s1406 + $0x1] sm:$0xff]
        %v1601 = vld [vmem:[%s1406 + $0x9] sm:$0xff]
        %v1602 = vld [vmem:[%s1406 + $0x19] sm:$0xff]
        %v1603 = vld [vmem:[%s1406 + $0x21] sm:$0xff]
        %v1604 = vld [vmem:[%s1406 + $0x31] sm:$0xff]
        %v1605 = vld [vmem:[%s1406 + $0x39] sm:$0xff]
        %v1606 = vld [vmem:[%s1406 + $0x49] sm:$0xff]
        %v1607 = vld [vmem:[%s1406 + $0x51] sm:$0xff]
        %v1608 = vld [vmem:[%s1406 + $0x61] sm:$0xff]
        %v1609 = vld [vmem:[%s1406 + $0x69] sm:$0xff]
        %v1610 = vld [vmem:[%s1406 + $0x79] sm:$0xff]
        %v1611 = vld [vmem:[%s1406 + $0x81] sm:$0xff]
        %v1612 = vld [vmem:[%s1406 + $0x91] sm:$0xff]
        %v1613 = vld [vmem:[%s1406 + $0x99] sm:$0xff]
        %v1614 = vld [vmem:[%s1406 + $0xa9] sm:$0xff]
        %v1615 = vld [vmem:[%s1406 + $0xb1] sm:$0xff]
        %v1616 = vld [vmem:[%s1406 + $0xc1] sm:$0xff]
        %v1617 = vld [vmem:[%s1406 + $0xc9] sm:$0xff]
        %v1618 = vld [vmem:[%s1406 + $0xd9] sm:$0xff]
        %v1619 = vld [vmem:[%s1406 + $0xe1] sm:$0xff]
        %v1620 = vld [vmem:[%s1406 + $0xf1] sm:$0xff]
        %v1621 = vld [vmem:[%s1406 + $0xf9] sm:$0xff]
        %v1622 = vld [vmem:[%s1406 + $0x109] sm:$0xff]
        %v1623 = vld [vmem:[%s1406 + $0x111] sm:$0xff]
        %v1624 = vld [vmem:[%s1406 + $0x121] sm:$0xff]
        %v1625 = vld [vmem:[%s1406 + $0x129] sm:$0xff]
        %v1626 = vld [vmem:[%s1406 + $0x139] sm:$0xff]
        %v1627 = vld [vmem:[%s1406 + $0x141] sm:$0xff]
        %v1628 = vld [vmem:[%s1406 + $0x151] sm:$0xff]
        %v1629 = vld [vmem:[%s1406 + $0x159] sm:$0xff]
        %v1630 = vld [vmem:[%s1406 + $0x169] sm:$0xff]
        %v1631 = vld [vmem:[%s1406 + $0x171] sm:$0xff]
        %1664 = vrot.lane.b32.xlu0 %v1600, 21
        %v1665 = vpop.permute.xlu0 %1664
        %1666 = vrot.lane.b32.xlu0 %v1601, 21
        %v1667 = vpop.permute.xlu0 %1666
        %1668 = vrot.lane.b32.xlu0 %v1602, 21
        %v1669 = vpop.permute.xlu0 %1668
        %1670 = vrot.lane.b32.xlu0 %v1603, 21
        %v1671 = vpop.permute.xlu0 %1670
        %1672 = vrot.lane.b32.xlu0 %v1604, 21
        %v1673 = vpop.permute.xlu0 %1672
        %1674 = vrot.lane.b32.xlu0 %v1605, 21
        %v1675 = vpop.permute.xlu0 %1674
        %1676 = vrot.lane.b32.xlu0 %v1606, 21
        %v1677 = vpop.permute.xlu0 %1676
        %1678 = vrot.lane.b32.xlu0 %v1607, 21
        %v1679 = vpop.permute.xlu0 %1678
        %1680 = vrot.lane.b32.xlu0 %v1608, 21
        %v1681 = vpop.permute.xlu0 %1680
        %1682 = vrot.lane.b32.xlu0 %v1609, 21
        %v1683 = vpop.permute.xlu0 %1682
        %1684 = vrot.lane.b32.xlu0 %v1610, 21
        %v1685 = vpop.permute.xlu0 %1684
        %1686 = vrot.lane.b32.xlu0 %v1611, 21
        %v1687 = vpop.permute.xlu0 %1686
        %1688 = vrot.lane.b32.xlu0 %v1612, 21
        %v1689 = vpop.permute.xlu0 %1688
        %1690 = vrot.lane.b32.xlu0 %v1613, 21
        %v1691 = vpop.permute.xlu0 %1690
        %1692 = vrot.lane.b32.xlu0 %v1614, 21
        %v1693 = vpop.permute.xlu0 %1692
        %1694 = vrot.lane.b32.xlu0 %v1615, 21
        %v1695 = vpop.permute.xlu0 %1694
        %1696 = vrot.lane.b32.xlu0 %v1616, 21
        %v1697 = vpop.permute.xlu0 %1696
        %1698 = vrot.lane.b32.xlu0 %v1617, 21
        %v1699 = vpop.permute.xlu0 %1698
        %1700 = vrot.lane.b32.xlu0 %v1618, 21
        %v1701 = vpop.permute.xlu0 %1700
        %1702 = vrot.lane.b32.xlu0 %v1619, 21
        %v1703 = vpop.permute.xlu0 %1702
        %1704 = vrot.lane.b32.xlu0 %v1620, 21
        %v1705 = vpop.permute.xlu0 %1704
        %1706 = vrot.lane.b32.xlu0 %v1621, 21
        %v1707 = vpop.permute.xlu0 %1706
        %1708 = vrot.lane.b32.xlu0 %v1622, 21
        %v1709 = vpop.permute.xlu0 %1708
        %1710 = vrot.lane.b32.xlu0 %v1623, 21
        %v1711 = vpop.permute.xlu0 %1710
        %1712 = vrot.lane.b32.xlu0 %v1624, 21
        %v1713 = vpop.permute.xlu0 %1712
        %1714 = vrot.lane.b32.xlu0 %v1625, 21
        %v1715 = vpop.permute.xlu0 %1714
        %1716 = vrot.lane.b32.xlu0 %v1626, 21
        %v1717 = vpop.permute.xlu0 %1716
        %1718 = vrot.lane.b32.xlu0 %v1627, 21
        %v1719 = vpop.permute.xlu0 %1718
        %1720 = vrot.lane.b32.xlu0 %v1628, 21
        %v1721 = vpop.permute.xlu0 %1720
        %1722 = vrot.lane.b32.xlu0 %v1629, 21
        %v1723 = vpop.permute.xlu0 %1722
        %1724 = vrot.lane.b32.xlu0 %v1630, 21
        %v1725 = vpop.permute.xlu0 %1724
        %1726 = vrot.lane.b32.xlu0 %v1631, 21
        %v1727 = vpop.permute.xlu0 %1726
        %vm1760 = vcmask 195752
        %1761 = vst.msk [vmem:[#allocation3] sm:$0xff] %vm1760, %v1665
        %1762 = vst.msk [vmem:[#allocation3 + $0x8] sm:$0xff] %vm1760, %v1667
        %1763 = vst.msk [vmem:[#allocation3 + $0x10] sm:$0xff] %vm1760, %v1669
        %1764 = vst.msk [vmem:[#allocation3 + $0x18] sm:$0xff] %vm1760, %v1671
        %1765 = vst.msk [vmem:[#allocation3 + $0x20] sm:$0xff] %vm1760, %v1673
        %1766 = vst.msk [vmem:[#allocation3 + $0x28] sm:$0xff] %vm1760, %v1675
        %1767 = vst.msk [vmem:[#allocation3 + $0x30] sm:$0xff] %vm1760, %v1677
        %1768 = vst.msk [vmem:[#allocation3 + $0x38] sm:$0xff] %vm1760, %v1679
        %1769 = vst.msk [vmem:[#allocation3 + $0x40] sm:$0xff] %vm1760, %v1681
        %1770 = vst.msk [vmem:[#allocation3 + $0x48] sm:$0xff] %vm1760, %v1683
        %1771 = vst.msk [vmem:[#allocation3 + $0x50] sm:$0xff] %vm1760, %v1685
        %1772 = vst.msk [vmem:[#allocation3 + $0x58] sm:$0xff] %vm1760, %v1687
        %1773 = vst.msk [vmem:[#allocation3 + $0x60] sm:$0xff] %vm1760, %v1689
        %1774 = vst.msk [vmem:[#allocation3 + $0x68] sm:$0xff] %vm1760, %v1691
        %1775 = vst.msk [vmem:[#allocation3 + $0x70] sm:$0xff] %vm1760, %v1693
        %1776 = vst.msk [vmem:[#allocation3 + $0x78] sm:$0xff] %vm1760, %v1695
        %1777 = vst.msk [vmem:[#allocation3 + $0x80] sm:$0xff] %vm1760, %v1697
        %1778 = vst.msk [vmem:[#allocation3 + $0x88] sm:$0xff] %vm1760, %v1699
        %1779 = vst.msk [vmem:[#allocation3 + $0x90] sm:$0xff] %vm1760, %v1701
        %1780 = vst.msk [vmem:[#allocation3 + $0x98] sm:$0xff] %vm1760, %v1703
        %1781 = vst.msk [vmem:[#allocation3 + $0xa0] sm:$0xff] %vm1760, %v1705
        %1782 = vst.msk [vmem:[#allocation3 + $0xa8] sm:$0xff] %vm1760, %v1707
        %1783 = vst.msk [vmem:[#allocation3 + $0xb0] sm:$0xff] %vm1760, %v1709
        %1784 = vst.msk [vmem:[#allocation3 + $0xb8] sm:$0xff] %vm1760, %v1711
        %1785 = vst.msk [vmem:[#allocation3 + $0xc0] sm:$0xff] %vm1760, %v1713
        %1786 = vst.msk [vmem:[#allocation3 + $0xc8] sm:$0xff] %vm1760, %v1715
        %1787 = vst.msk [vmem:[#allocation3 + $0xd0] sm:$0xff] %vm1760, %v1717
        %1788 = vst.msk [vmem:[#allocation3 + $0xd8] sm:$0xff] %vm1760, %v1719
        %1789 = vst.msk [vmem:[#allocation3 + $0xe0] sm:$0xff] %vm1760, %v1721
        %1790 = vst.msk [vmem:[#allocation3 + $0xe8] sm:$0xff] %vm1760, %v1723
        %1791 = vst.msk [vmem:[#allocation3 + $0xf0] sm:$0xff] %vm1760, %v1725
        %1792 = vst.msk [vmem:[#allocation3 + $0xf8] sm:$0xff] %vm1760, %v1727
        %v1793 = vld [vmem:[%s1406 + $0x2] sm:$0xff]
        %v1794 = vld [vmem:[%s1406 + $0xa] sm:$0xff]
        %v1795 = vld [vmem:[%s1406 + $0x1a] sm:$0xff]
        %v1796 = vld [vmem:[%s1406 + $0x22] sm:$0xff]
        %v1797 = vld [vmem:[%s1406 + $0x32] sm:$0xff]
        %v1798 = vld [vmem:[%s1406 + $0x3a] sm:$0xff]
        %v1799 = vld [vmem:[%s1406 + $0x4a] sm:$0xff]
        %v1800 = vld [vmem:[%s1406 + $0x52] sm:$0xff]
        %v1801 = vld [vmem:[%s1406 + $0x62] sm:$0xff]
        %v1802 = vld [vmem:[%s1406 + $0x6a] sm:$0xff]
        %v1803 = vld [vmem:[%s1406 + $0x7a] sm:$0xff]
        %v1804 = vld [vmem:[%s1406 + $0x82] sm:$0xff]
        %v1805 = vld [vmem:[%s1406 + $0x92] sm:$0xff]
        %v1806 = vld [vmem:[%s1406 + $0x9a] sm:$0xff]
        %v1807 = vld [vmem:[%s1406 + $0xaa] sm:$0xff]
        %v1808 = vld [vmem:[%s1406 + $0xb2] sm:$0xff]
        %v1809 = vld [vmem:[%s1406 + $0xc2] sm:$0xff]
        %v1810 = vld [vmem:[%s1406 + $0xca] sm:$0xff]
        %v1811 = vld [vmem:[%s1406 + $0xda] sm:$0xff]
        %v1812 = vld [vmem:[%s1406 + $0xe2] sm:$0xff]
        %v1813 = vld [vmem:[%s1406 + $0xf2] sm:$0xff]
        %v1814 = vld [vmem:[%s1406 + $0xfa] sm:$0xff]
        %v1815 = vld [vmem:[%s1406 + $0x10a] sm:$0xff]
        %v1816 = vld [vmem:[%s1406 + $0x112] sm:$0xff]
        %v1817 = vld [vmem:[%s1406 + $0x122] sm:$0xff]
        %v1818 = vld [vmem:[%s1406 + $0x12a] sm:$0xff]
        %v1819 = vld [vmem:[%s1406 + $0x13a] sm:$0xff]
        %v1820 = vld [vmem:[%s1406 + $0x142] sm:$0xff]
        %v1821 = vld [vmem:[%s1406 + $0x152] sm:$0xff]
        %v1822 = vld [vmem:[%s1406 + $0x15a] sm:$0xff]
        %v1823 = vld [vmem:[%s1406 + $0x16a] sm:$0xff]
        %v1824 = vld [vmem:[%s1406 + $0x172] sm:$0xff]
        %1857 = vrot.lane.b32.xlu0 %v1793, 24
        %v1858 = vpop.permute.xlu0 %1857
        %1859 = vrot.lane.b32.xlu0 %v1794, 24
        %v1860 = vpop.permute.xlu0 %1859
        %1861 = vrot.lane.b32.xlu0 %v1795, 24
        %v1862 = vpop.permute.xlu0 %1861
        %1863 = vrot.lane.b32.xlu0 %v1796, 24
        %v1864 = vpop.permute.xlu0 %1863
        %1865 = vrot.lane.b32.xlu0 %v1797, 24
        %v1866 = vpop.permute.xlu0 %1865
        %1867 = vrot.lane.b32.xlu0 %v1798, 24
        %v1868 = vpop.permute.xlu0 %1867
        %1869 = vrot.lane.b32.xlu0 %v1799, 24
        %v1870 = vpop.permute.xlu0 %1869
        %1871 = vrot.lane.b32.xlu0 %v1800, 24
        %v1872 = vpop.permute.xlu0 %1871
        %1873 = vrot.lane.b32.xlu0 %v1801, 24
        %v1874 = vpop.permute.xlu0 %1873
        %1875 = vrot.lane.b32.xlu0 %v1802, 24
        %v1876 = vpop.permute.xlu0 %1875
        %1877 = vrot.lane.b32.xlu0 %v1803, 24
        %v1878 = vpop.permute.xlu0 %1877
        %1879 = vrot.lane.b32.xlu0 %v1804, 24
        %v1880 = vpop.permute.xlu0 %1879
        %1881 = vrot.lane.b32.xlu0 %v1805, 24
        %v1882 = vpop.permute.xlu0 %1881
        %1883 = vrot.lane.b32.xlu0 %v1806, 24
        %v1884 = vpop.permute.xlu0 %1883
        %1885 = vrot.lane.b32.xlu0 %v1807, 24
        %v1886 = vpop.permute.xlu0 %1885
        %1887 = vrot.lane.b32.xlu0 %v1808, 24
        %v1888 = vpop.permute.xlu0 %1887
        %1889 = vrot.lane.b32.xlu0 %v1809, 24
        %v1890 = vpop.permute.xlu0 %1889
        %1891 = vrot.lane.b32.xlu0 %v1810, 24
        %v1892 = vpop.permute.xlu0 %1891
        %1893 = vrot.lane.b32.xlu0 %v1811, 24
        %v1894 = vpop.permute.xlu0 %1893
        %1895 = vrot.lane.b32.xlu0 %v1812, 24
        %v1896 = vpop.permute.xlu0 %1895
        %1897 = vrot.lane.b32.xlu0 %v1813, 24
        %v1898 = vpop.permute.xlu0 %1897
        %1899 = vrot.lane.b32.xlu0 %v1814, 24
        %v1900 = vpop.permute.xlu0 %1899
        %1901 = vrot.lane.b32.xlu0 %v1815, 24
        %v1902 = vpop.permute.xlu0 %1901
        %1903 = vrot.lane.b32.xlu0 %v1816, 24
        %v1904 = vpop.permute.xlu0 %1903
        %1905 = vrot.lane.b32.xlu0 %v1817, 24
        %v1906 = vpop.permute.xlu0 %1905
        %1907 = vrot.lane.b32.xlu0 %v1818, 24
        %v1908 = vpop.permute.xlu0 %1907
        %1909 = vrot.lane.b32.xlu0 %v1819, 24
        %v1910 = vpop.permute.xlu0 %1909
        %1911 = vrot.lane.b32.xlu0 %v1820, 24
        %v1912 = vpop.permute.xlu0 %1911
        %1913 = vrot.lane.b32.xlu0 %v1821, 24
        %v1914 = vpop.permute.xlu0 %1913
        %1915 = vrot.lane.b32.xlu0 %v1822, 24
        %v1916 = vpop.permute.xlu0 %1915
        %1917 = vrot.lane.b32.xlu0 %v1823, 24
        %v1918 = vpop.permute.xlu0 %1917
        %1919 = vrot.lane.b32.xlu0 %v1824, 24
        %v1920 = vpop.permute.xlu0 %1919
        %vm1953 = vcmask 220352
        %1954 = vst.msk [vmem:[#allocation3] sm:$0xff] %vm1953, %v1858
        %1955 = vst.msk [vmem:[#allocation3 + $0x8] sm:$0xff] %vm1953, %v1860
        %1956 = vst.msk [vmem:[#allocation3 + $0x10] sm:$0xff] %vm1953, %v1862
        %1957 = vst.msk [vmem:[#allocation3 + $0x18] sm:$0xff] %vm1953, %v1864
        %1958 = vst.msk [vmem:[#allocation3 + $0x20] sm:$0xff] %vm1953, %v1866
        %1959 = vst.msk [vmem:[#allocation3 + $0x28] sm:$0xff] %vm1953, %v1868
        %1960 = vst.msk [vmem:[#allocation3 + $0x30] sm:$0xff] %vm1953, %v1870
        %1961 = vst.msk [vmem:[#allocation3 + $0x38] sm:$0xff] %vm1953, %v1872
        %1962 = vst.msk [vmem:[#allocation3 + $0x40] sm:$0xff] %vm1953, %v1874
        %1963 = vst.msk [vmem:[#allocation3 + $0x48] sm:$0xff] %vm1953, %v1876
        %1964 = vst.msk [vmem:[#allocation3 + $0x50] sm:$0xff] %vm1953, %v1878
        %1965 = vst.msk [vmem:[#allocation3 + $0x58] sm:$0xff] %vm1953, %v1880
        %1966 = vst.msk [vmem:[#allocation3 + $0x60] sm:$0xff] %vm1953, %v1882
        %1967 = vst.msk [vmem:[#allocation3 + $0x68] sm:$0xff] %vm1953, %v1884
        %1968 = vst.msk [vmem:[#allocation3 + $0x70] sm:$0xff] %vm1953, %v1886
        %1969 = vst.msk [vmem:[#allocation3 + $0x78] sm:$0xff] %vm1953, %v1888
        %1970 = vst.msk [vmem:[#allocation3 + $0x80] sm:$0xff] %vm1953, %v1890
        %1971 = vst.msk [vmem:[#allocation3 + $0x88] sm:$0xff] %vm1953, %v1892
        %1972 = vst.msk [vmem:[#allocation3 + $0x90] sm:$0xff] %vm1953, %v1894
        %1973 = vst.msk [vmem:[#allocation3 + $0x98] sm:$0xff] %vm1953, %v1896
        %1974 = vst.msk [vmem:[#allocation3 + $0xa0] sm:$0xff] %vm1953, %v1898
        %1975 = vst.msk [vmem:[#allocation3 + $0xa8] sm:$0xff] %vm1953, %v1900
        %1976 = vst.msk [vmem:[#allocation3 + $0xb0] sm:$0xff] %vm1953, %v1902
        %1977 = vst.msk [vmem:[#allocation3 + $0xb8] sm:$0xff] %vm1953, %v1904
        %1978 = vst.msk [vmem:[#allocation3 + $0xc0] sm:$0xff] %vm1953, %v1906
        %1979 = vst.msk [vmem:[#allocation3 + $0xc8] sm:$0xff] %vm1953, %v1908
        %1980 = vst.msk [vmem:[#allocation3 + $0xd0] sm:$0xff] %vm1953, %v1910
        %1981 = vst.msk [vmem:[#allocation3 + $0xd8] sm:$0xff] %vm1953, %v1912
        %1982 = vst.msk [vmem:[#allocation3 + $0xe0] sm:$0xff] %vm1953, %v1914
        %1983 = vst.msk [vmem:[#allocation3 + $0xe8] sm:$0xff] %vm1953, %v1916
        %1984 = vst.msk [vmem:[#allocation3 + $0xf0] sm:$0xff] %vm1953, %v1918
        %1985 = vst.msk [vmem:[#allocation3 + $0xf8] sm:$0xff] %vm1953, %v1920
        %v1986 = vld [vmem:[#allocation3] sm:$0xff]
        %v1987 = vld [vmem:[#allocation3 + $0x8] sm:$0xff]
        %v1988 = vld [vmem:[#allocation3 + $0x10] sm:$0xff]
        %v1989 = vld [vmem:[#allocation3 + $0x18] sm:$0xff]
        %v1990 = vld [vmem:[#allocation3 + $0x20] sm:$0xff]
        %v1991 = vld [vmem:[#allocation3 + $0x28] sm:$0xff]
        %v1992 = vld [vmem:[#allocation3 + $0x30] sm:$0xff]
        %v1993 = vld [vmem:[#allocation3 + $0x38] sm:$0xff]
        %v1994 = vld [vmem:[#allocation3 + $0x40] sm:$0xff]
        %v1995 = vld [vmem:[#allocation3 + $0x48] sm:$0xff]
        %v1996 = vld [vmem:[#allocation3 + $0x50] sm:$0xff]
        %v1997 = vld [vmem:[#allocation3 + $0x58] sm:$0xff]
        %v1998 = vld [vmem:[#allocation3 + $0x60] sm:$0xff]
        %v1999 = vld [vmem:[#allocation3 + $0x68] sm:$0xff]
        %v2000 = vld [vmem:[#allocation3 + $0x70] sm:$0xff]
        %v2001 = vld [vmem:[#allocation3 + $0x78] sm:$0xff]
        %v2002 = vld [vmem:[#allocation3 + $0x80] sm:$0xff]
        %v2003 = vld [vmem:[#allocation3 + $0x88] sm:$0xff]
        %v2004 = vld [vmem:[#allocation3 + $0x90] sm:$0xff]
        %v2005 = vld [vmem:[#allocation3 + $0x98] sm:$0xff]
        %v2006 = vld [vmem:[#allocation3 + $0xa0] sm:$0xff]
        %v2007 = vld [vmem:[#allocation3 + $0xa8] sm:$0xff]
        %v2008 = vld [vmem:[#allocation3 + $0xb0] sm:$0xff]
        %v2009 = vld [vmem:[#allocation3 + $0xb8] sm:$0xff]
        %v2010 = vld [vmem:[#allocation3 + $0xc0] sm:$0xff]
        %v2011 = vld [vmem:[#allocation3 + $0xc8] sm:$0xff]
        %v2012 = vld [vmem:[#allocation3 + $0xd0] sm:$0xff]
        %v2013 = vld [vmem:[#allocation3 + $0xd8] sm:$0xff]
        %v2014 = vld [vmem:[#allocation3 + $0xe0] sm:$0xff]
        %v2015 = vld [vmem:[#allocation3 + $0xe8] sm:$0xff]
        %v2016 = vld [vmem:[#allocation3 + $0xf0] sm:$0xff]
        %v2017 = vld [vmem:[#allocation3 + $0xf8] sm:$0xff]
        %v2018 = vld [vmem:[%s1] sm:$0xff]
        %v2019 = vld [vmem:[%s1 + $0x8] sm:$0xff]
        %v2020 = vld [vmem:[%s1 + $0x10] sm:$0xff]
        %v2021 = vld [vmem:[%s1 + $0x18] sm:$0xff]
        %v2022 = vld [vmem:[%s2] sm:$0x1]
        %v2024 = vlaneseq
        %v2025 = vshrl.u32 %v2024, 7
        %v2026 = vsub.s32 0, %v2025
        %v2027 = vrot.slane %v2022, %v2026
        %v2030 = vsel %vm344, %v1986, 0
        %v2033 = vsel %vm344, %v1987, 0
        %v2036 = vsel %vm344, %v1988, 0
        %v2039 = vsel %vm344, %v1989, 0
        %v2042 = vsel %vm344, %v1990, 0
        %v2045 = vsel %vm344, %v1991, 0
        %v2048 = vsel %vm344, %v1992, 0
        %v2051 = vsel %vm344, %v1993, 0
        %v2054 = vsel %vm344, %v1994, 0
        %v2057 = vsel %vm344, %v1995, 0
        %v2060 = vsel %vm344, %v1996, 0
        %v2063 = vsel %vm344, %v1997, 0
        %v2066 = vsel %vm344, %v1998, 0
        %v2069 = vsel %vm344, %v1999, 0
        %v2072 = vsel %vm344, %v2000, 0
        %v2075 = vsel %vm344, %v2001, 0
        %v2078 = vsel %vm344, %v2002, 0
        %v2081 = vsel %vm344, %v2003, 0
        %v2084 = vsel %vm344, %v2004, 0
        %v2087 = vsel %vm344, %v2005, 0
        %v2090 = vsel %vm344, %v2006, 0
        %v2093 = vsel %vm344, %v2007, 0
        %v2096 = vsel %vm344, %v2008, 0
        %v2099 = vsel %vm344, %v2009, 0
        %v2102 = vsel %vm344, %v2010, 0
        %v2105 = vsel %vm344, %v2011, 0
        %v2108 = vsel %vm344, %v2012, 0
        %v2111 = vsel %vm344, %v2013, 0
        %v2114 = vsel %vm344, %v2014, 0
        %v2117 = vsel %vm344, %v2015, 0
        %v2120 = vsel %vm344, %v2016, 0
        %v2123 = vsel %vm344, %v2017, 0
        %2125 = vmatprep.subr.mxu0 0.0
        %2126 = vmatpush1.msra.mxu0 %v2018
        %2127 = vmatprep.subr.mxu0 0.0
        %2128 = vmatpush1.msra.mxu0 %v2019
        %2129 = vmatprep.subr.mxu0 0.0
        %2130 = vmatpush1.msra.mxu0 %v2020
        %2131 = vmatprep.subr.mxu0 0.0
        %2132 = vmatpush1.msra.mxu0 %v2021
        %2133 = vmatprep.subr.mxu0 0.0
        %2134 = vmatpush1.msra.mxu0 0.0
        %2135 = vmatprep.subr.mxu0 0.0
        %2136 = vmatpush1.msra.mxu0 0.0
        %2137 = vmatprep.subr.mxu0 0.0
        %2138 = vmatpush1.msra.mxu0 0.0
        %2139 = vmatprep.subr.mxu0 0.0
        %2140 = vmatpush1.msra.mxu0 0.0
        %2141 = vmatprep.subr.mxu0 0.0
        %2142 = vmatpush1.msra.mxu0 0.0
        %2143 = vmatprep.subr.mxu0 0.0
        %2144 = vmatpush1.msra.mxu0 0.0
        %2145 = vmatprep.subr.mxu0 0.0
        %2146 = vmatpush1.msra.mxu0 0.0
        %2147 = vmatprep.subr.mxu0 0.0
        %2148 = vmatpush1.msra.mxu0 0.0
        %2149 = vmatprep.subr.mxu0 0.0
        %2150 = vmatpush1.msra.mxu0 0.0
        %2151 = vmatprep.subr.mxu0 0.0
        %2152 = vmatpush1.msra.mxu0 0.0
        %2153 = vmatprep.subr.mxu0 0.0
        %2154 = vmatpush1.msra.mxu0 0.0
        %2155 = vmatprep.subr.mxu0 0.0
        %2156 = vmatpush1.msra.mxu0 0.0
        %2157 = vmatprep.subr.mxu0 0.0
        %2158 = vmatpush1.msra.mxu0 0.0
        %2159 = vmatprep.subr.mxu0 0.0
        %2160 = vmatpush1.msra.mxu0 0.0
        %2161 = vmatprep.subr.mxu0 0.0
        %2162 = vmatpush1.msra.mxu0 0.0
        %2163 = vmatprep.subr.mxu0 0.0
        %2164 = vmatpush1.msra.mxu0 0.0
        %2165 = vmatprep.subr.mxu0 0.0
        %2166 = vmatpush1.msra.mxu0 0.0
        %2167 = vmatprep.subr.mxu0 0.0
        %2168 = vmatpush1.msra.mxu0 0.0
        %2169 = vmatprep.subr.mxu0 0.0
        %2170 = vmatpush1.msra.mxu0 0.0
        %2171 = vmatprep.subr.mxu0 0.0
        %2172 = vmatpush1.msra.mxu0 0.0
        %2173 = vmatprep.subr.mxu0 0.0
        %2174 = vmatpush1.msra.mxu0 0.0
        %2175 = vmatprep.subr.mxu0 0.0
        %2176 = vmatpush1.msra.mxu0 0.0
        %2177 = vmatprep.subr.mxu0 0.0
        %2178 = vmatpush1.msra.mxu0 0.0
        %2179 = vmatprep.subr.mxu0 0.0
        %2180 = vmatpush1.msra.mxu0 0.0
        %2181 = vmatprep.subr.mxu0 0.0
        %2182 = vmatpush1.msra.mxu0 0.0
        %2183 = vmatprep.subr.mxu0 0.0
        %2184 = vmatpush1.msra.mxu0 0.0
        %2185 = vmatprep.subr.mxu0 0.0
        %2186 = vmatpush1.msra.mxu0 0.0
        %2187 = vmatprep.subr.mxu0 0.0
        %2188 = vmatpush1.msra.mxu0 0.0
        %2189 = vmatprep.mubr.f32.mxu0 0.0
        %2190 = vmatmul.mubr.f32.gmra.mrb[0].mxu0 %v2030
        %v2191 = vpop.f32.mrb[0].mxu0
        %v2192 = vadd.f32 %v2027, %v2191
        %v2193 = vpop.f32.mrb[0].mxu0
        %2194 = vmatprep.mubr.f32.mxu0 0.0
        %2195 = vmatmul.mubr.f32.gmra.mrb[0].mxu0 %v2033
        %v2196 = vpop.f32.mrb[0].mxu0
        %v2197 = vadd.f32 %v2027, %v2196
        %v2198 = vpop.f32.mrb[0].mxu0
        %2199 = vmatprep.mubr.f32.mxu0 0.0
        %2200 = vmatmul.mubr.f32.gmra.mrb[0].mxu0 %v2036
        %v2201 = vpop.f32.mrb[0].mxu0
        %v2202 = vadd.f32 %v2027, %v2201
        %v2203 = vpop.f32.mrb[0].mxu0
        %2204 = vmatprep.mubr.f32.mxu0 0.0
        %2205 = vmatmul.mubr.f32.gmra.mrb[0].mxu0 %v2039
        %v2206 = vpop.f32.mrb[0].mxu0
        %v2207 = vadd.f32 %v2027, %v2206
        %v2208 = vpop.f32.mrb[0].mxu0
        %2209 = vmatprep.mubr.f32.mxu0 0.0
        %2210 = vmatmul.mubr.f32.gmra.mrb[0].mxu0 %v2042
        %v2211 = vpop.f32.mrb[0].mxu0
        %v2212 = vadd.f32 %v2027, %v2211
        %v2213 = vpop.f32.mrb[0].mxu0
        %2214 = vmatprep.mubr.f32.mxu0 0.0
        %2215 = vmatmul.mubr.f32.gmra.mrb[0].mxu0 %v2045
        %v2216 = vpop.f32.mrb[0].mxu0
        %v2217 = vadd.f32 %v2027, %v2216
        %v2218 = vpop.f32.mrb[0].mxu0
        %2219 = vmatprep.mubr.f32.mxu0 0.0
        %2220 = vmatmul.mubr.f32.gmra.mrb[0].mxu0 %v2048
        %v2221 = vpop.f32.mrb[0].mxu0
        %v2222 = vadd.f32 %v2027, %v2221
        %v2223 = vpop.f32.mrb[0].mxu0
        %2224 = vmatprep.mubr.f32.mxu0 0.0
        %2225 = vmatmul.mubr.f32.gmra.mrb[0].mxu0 %v2051
        %v2226 = vpop.f32.mrb[0].mxu0
        %v2227 = vadd.f32 %v2027, %v2226
        %v2228 = vpop.f32.mrb[0].mxu0
        %2229 = vmatprep.mubr.f32.mxu0 0.0
        %2230 = vmatmul.mubr.f32.gmra.mrb[0].mxu0 %v2054
        %v2231 = vpop.f32.mrb[0].mxu0
        %v2232 = vadd.f32 %v2027, %v2231
        %v2233 = vpop.f32.mrb[0].mxu0
        %2234 = vmatprep.mubr.f32.mxu0 0.0
        %2235 = vmatmul.mubr.f32.gmra.mrb[0].mxu0 %v2057
        %v2236 = vpop.f32.mrb[0].mxu0
        %v2237 = vadd.f32 %v2027, %v2236
        %v2238 = vpop.f32.mrb[0].mxu0
        %2239 = vmatprep.mubr.f32.mxu0 0.0
        %2240 = vmatmul.mubr.f32.gmra.mrb[0].mxu0 %v2060
        %v2241 = vpop.f32.mrb[0].mxu0
        %v2242 = vadd.f32 %v2027, %v2241
        %v2243 = vpop.f32.mrb[0].mxu0
        %2244 = vmatprep.mubr.f32.mxu0 0.0
        %2245 = vmatmul.mubr.f32.gmra.mrb[0].mxu0 %v2063
        %v2246 = vpop.f32.mrb[0].mxu0
        %v2247 = vadd.f32 %v2027, %v2246
        %v2248 = vpop.f32.mrb[0].mxu0
        %2249 = vmatprep.mubr.f32.mxu0 0.0
        %2250 = vmatmul.mubr.f32.gmra.mrb[0].mxu0 %v2066
        %v2251 = vpop.f32.mrb[0].mxu0
        %v2252 = vadd.f32 %v2027, %v2251
        %v2253 = vpop.f32.mrb[0].mxu0
        %2254 = vmatprep.mubr.f32.mxu0 0.0
        %2255 = vmatmul.mubr.f32.gmra.mrb[0].mxu0 %v2069
        %v2256 = vpop.f32.mrb[0].mxu0
        %v2257 = vadd.f32 %v2027, %v2256
        %v2258 = vpop.f32.mrb[0].mxu0
        %2259 = vmatprep.mubr.f32.mxu0 0.0
        %2260 = vmatmul.mubr.f32.gmra.mrb[0].mxu0 %v2072
        %v2261 = vpop.f32.mrb[0].mxu0
        %v2262 = vadd.f32 %v2027, %v2261
        %v2263 = vpop.f32.mrb[0].mxu0
        %2264 = vmatprep.mubr.f32.mxu0 0.0
        %2265 = vmatmul.mubr.f32.gmra.mrb[0].mxu0 %v2075
        %v2266 = vpop.f32.mrb[0].mxu0
        %v2267 = vadd.f32 %v2027, %v2266
        %v2268 = vpop.f32.mrb[0].mxu0
        %2269 = vmatprep.mubr.f32.mxu0 0.0
        %2270 = vmatmul.mubr.f32.gmra.mrb[0].mxu0 %v2078
        %v2271 = vpop.f32.mrb[0].mxu0
        %v2272 = vadd.f32 %v2027, %v2271
        %v2273 = vpop.f32.mrb[0].mxu0
        %2274 = vmatprep.mubr.f32.mxu0 0.0
        %2275 = vmatmul.mubr.f32.gmra.mrb[0].mxu0 %v2081
        %v2276 = vpop.f32.mrb[0].mxu0
        %v2277 = vadd.f32 %v2027, %v2276
        %v2278 = vpop.f32.mrb[0].mxu0
        %2279 = vmatprep.mubr.f32.mxu0 0.0
        %2280 = vmatmul.mubr.f32.gmra.mrb[0].mxu0 %v2084
        %v2281 = vpop.f32.mrb[0].mxu0
        %v2282 = vadd.f32 %v2027, %v2281
        %v2283 = vpop.f32.mrb[0].mxu0
        %2284 = vmatprep.mubr.f32.mxu0 0.0
        %2285 = vmatmul.mubr.f32.gmra.mrb[0].mxu0 %v2087
        %v2286 = vpop.f32.mrb[0].mxu0
        %v2287 = vadd.f32 %v2027, %v2286
        %v2288 = vpop.f32.mrb[0].mxu0
        %2289 = vmatprep.mubr.f32.mxu0 0.0
        %2290 = vmatmul.mubr.f32.gmra.mrb[0].mxu0 %v2090
        %v2291 = vpop.f32.mrb[0].mxu0
        %v2292 = vadd.f32 %v2027, %v2291
        %v2293 = vpop.f32.mrb[0].mxu0
        %2294 = vmatprep.mubr.f32.mxu0 0.0
        %2295 = vmatmul.mubr.f32.gmra.mrb[0].mxu0 %v2093
        %v2296 = vpop.f32.mrb[0].mxu0
        %v2297 = vadd.f32 %v2027, %v2296
        %v2298 = vpop.f32.mrb[0].mxu0
        %2299 = vmatprep.mubr.f32.mxu0 0.0
        %2300 = vmatmul.mubr.f32.gmra.mrb[0].mxu0 %v2096
        %v2301 = vpop.f32.mrb[0].mxu0
        %v2302 = vadd.f32 %v2027, %v2301
        %v2303 = vpop.f32.mrb[0].mxu0
        %2304 = vmatprep.mubr.f32.mxu0 0.0
        %2305 = vmatmul.mubr.f32.gmra.mrb[0].mxu0 %v2099
        %v2306 = vpop.f32.mrb[0].mxu0
        %v2307 = vadd.f32 %v2027, %v2306
        %v2308 = vpop.f32.mrb[0].mxu0
        %2309 = vmatprep.mubr.f32.mxu0 0.0
        %2310 = vmatmul.mubr.f32.gmra.mrb[0].mxu0 %v2102
        %v2311 = vpop.f32.mrb[0].mxu0
        %v2312 = vadd.f32 %v2027, %v2311
        %v2313 = vpop.f32.mrb[0].mxu0
        %2314 = vmatprep.mubr.f32.mxu0 0.0
        %2315 = vmatmul.mubr.f32.gmra.mrb[0].mxu0 %v2105
        %v2316 = vpop.f32.mrb[0].mxu0
        %v2317 = vadd.f32 %v2027, %v2316
        %v2318 = vpop.f32.mrb[0].mxu0
        %2319 = vmatprep.mubr.f32.mxu0 0.0
        %2320 = vmatmul.mubr.f32.gmra.mrb[0].mxu0 %v2108
        %v2321 = vpop.f32.mrb[0].mxu0
        %v2322 = vadd.f32 %v2027, %v2321
        %v2323 = vpop.f32.mrb[0].mxu0
        %2324 = vmatprep.mubr.f32.mxu0 0.0
        %2325 = vmatmul.mubr.f32.gmra.mrb[0].mxu0 %v2111
        %v2326 = vpop.f32.mrb[0].mxu0
        %v2327 = vadd.f32 %v2027, %v2326
        %v2328 = vpop.f32.mrb[0].mxu0
        %2329 = vmatprep.mubr.f32.mxu0 0.0
        %2330 = vmatmul.mubr.f32.gmra.mrb[0].mxu0 %v2114
        %v2331 = vpop.f32.mrb[0].mxu0
        %v2332 = vadd.f32 %v2027, %v2331
        %v2333 = vpop.f32.mrb[0].mxu0
        %2334 = vmatprep.mubr.f32.mxu0 0.0
        %2335 = vmatmul.mubr.f32.gmra.mrb[0].mxu0 %v2117
        %v2336 = vpop.f32.mrb[0].mxu0
        %v2337 = vadd.f32 %v2027, %v2336
        %v2338 = vpop.f32.mrb[0].mxu0
        %2339 = vmatprep.mubr.f32.mxu0 0.0
        %2340 = vmatmul.mubr.f32.gmra.mrb[0].mxu0 %v2120
        %v2341 = vpop.f32.mrb[0].mxu0
        %v2342 = vadd.f32 %v2027, %v2341
        %v2343 = vpop.f32.mrb[0].mxu0
        %2344 = vmatprep.mubr.f32.mxu0 0.0
        %2345 = vmatmul.mubr.f32.gmra.mrb[0].mxu0 %v2123
        %v2346 = vpop.f32.mrb[0].mxu0
        %v2347 = vadd.f32 %v2027, %v2346
        %v2348 = vpop.f32.mrb[0].mxu0
        %2349 = vdwg.mxu0
        %v2350 = vmax.f32 %v2192, 0.0
        %v2351 = vmax.f32 %v2197, 0.0
        %v2352 = vmax.f32 %v2202, 0.0
        %v2353 = vmax.f32 %v2207, 0.0
        %v2354 = vmax.f32 %v2212, 0.0
        %v2355 = vmax.f32 %v2217, 0.0
        %v2356 = vmax.f32 %v2222, 0.0
        %v2357 = vmax.f32 %v2227, 0.0
        %v2358 = vmax.f32 %v2232, 0.0
        %v2359 = vmax.f32 %v2237, 0.0
        %v2360 = vmax.f32 %v2242, 0.0
        %v2361 = vmax.f32 %v2247, 0.0
        %v2362 = vmax.f32 %v2252, 0.0
        %v2363 = vmax.f32 %v2257, 0.0
        %v2364 = vmax.f32 %v2262, 0.0
        %v2365 = vmax.f32 %v2267, 0.0
        %v2366 = vmax.f32 %v2272, 0.0
        %v2367 = vmax.f32 %v2277, 0.0
        %v2368 = vmax.f32 %v2282, 0.0
        %v2369 = vmax.f32 %v2287, 0.0
        %v2370 = vmax.f32 %v2292, 0.0
        %v2371 = vmax.f32 %v2297, 0.0
        %v2372 = vmax.f32 %v2302, 0.0
        %v2373 = vmax.f32 %v2307, 0.0
        %v2374 = vmax.f32 %v2312, 0.0
        %v2375 = vmax.f32 %v2317, 0.0
        %v2376 = vmax.f32 %v2322, 0.0
        %v2377 = vmax.f32 %v2327, 0.0
        %v2378 = vmax.f32 %v2332, 0.0
        %v2379 = vmax.f32 %v2337, 0.0
        %v2380 = vmax.f32 %v2342, 0.0
        %v2381 = vmax.f32 %v2347, 0.0
        %v2382 = vld [vmem:[%s3] sm:$0xff]
        %v2383 = vld [vmem:[%s3 + $0x8] sm:$0xff]
        %v2384 = vld [vmem:[%s4] sm:$0xff]
        %v2385 = vld [vmem:[%s4 + $0x8] sm:$0xff]
        %2387 = vset.pattern.permute.xlu0 0
        %2388 = vperm.xlu0 %2387, %v2384
        %v2389 = vpop.permute.xlu0 %2388
        %2392 = vset.pattern.permute.xlu0 0
        %2393 = vperm.xlu0 %2392, %v2385
        %v2394 = vpop.permute.xlu0 %2393
        %v2397 = vsel %vm344, %v2382, 0
        %v2400 = vsel %vm344, %v2383, 0
        %v2403 = vsel %vm344, %v2350, 0
        %v2406 = vsel %vm344, %v2351, 0
        %v2409 = vsel %vm344, %v2352, 0
        %v2412 = vsel %vm344, %v2353, 0
        %v2415 = vsel %vm344, %v2354, 0
        %v2418 = vsel %vm344, %v2355, 0
        %v2421 = vsel %vm344, %v2356, 0
        %v2424 = vsel %vm344, %v2357, 0
        %v2427 = vsel %vm344, %v2358, 0
        %v2430 = vsel %vm344, %v2359, 0
        %v2433 = vsel %vm344, %v2360, 0
        %v2436 = vsel %vm344, %v2361, 0
        %v2439 = vsel %vm344, %v2362, 0
        %v2442 = vsel %vm344, %v2363, 0
        %v2445 = vsel %vm344, %v2364, 0
        %v2448 = vsel %vm344, %v2365, 0
        %v2451 = vsel %vm344, %v2366, 0
        %v2454 = vsel %vm344, %v2367, 0
        %v2457 = vsel %vm344, %v2368, 0
        %v2460 = vsel %vm344, %v2369, 0
        %v2463 = vsel %vm344, %v2370, 0
        %v2466 = vsel %vm344, %v2371, 0
        %v2469 = vsel %vm344, %v2372, 0
        %v2472 = vsel %vm344, %v2373, 0
        %v2475 = vsel %vm344, %v2374, 0
        %v2478 = vsel %vm344, %v2375, 0
        %v2481 = vsel %vm344, %v2376, 0
        %v2484 = vsel %vm344, %v2377, 0
        %v2487 = vsel %vm344, %v2378, 0
        %v2490 = vsel %vm344, %v2379, 0
        %v2493 = vsel %vm344, %v2380, 0
        %v2496 = vsel %vm344, %v2381, 0
        %2498 = vmatprep.subr.mxu0 0.0
        %2499 = vmatpush1.xpose.msra.mxu0 %v2403
        %2500 = vmatprep.subr.mxu0 0.0
        %2501 = vmatpush1.xpose.msra.mxu0 %v2406
        %2502 = vmatprep.subr.mxu0 0.0
        %2503 = vmatpush1.xpose.msra.mxu0 %v2409
        %2504 = vmatprep.subr.mxu0 0.0
        %2505 = vmatpush1.xpose.msra.mxu0 %v2412
        %2506 = vmatprep.subr.mxu0 0.0
        %2507 = vmatpush1.xpose.msra.mxu0 %v2415
        %2508 = vmatprep.subr.mxu0 0.0
        %2509 = vmatpush1.xpose.msra.mxu0 %v2418
        %2510 = vmatprep.subr.mxu0 0.0
        %2511 = vmatpush1.xpose.msra.mxu0 %v2421
        %2512 = vmatprep.subr.mxu0 0.0
        %2513 = vmatpush1.xpose.msra.mxu0 %v2424
        %2514 = vmatprep.subr.mxu0 0.0
        %2515 = vmatpush1.xpose.msra.mxu0 %v2427
        %2516 = vmatprep.subr.mxu0 0.0
        %2517 = vmatpush1.xpose.msra.mxu0 %v2430
        %2518 = vmatprep.subr.mxu0 0.0
        %2519 = vmatpush1.xpose.msra.mxu0 %v2433
        %2520 = vmatprep.subr.mxu0 0.0
        %2521 = vmatpush1.xpose.msra.mxu0 %v2436
        %2522 = vmatprep.subr.mxu0 0.0
        %2523 = vmatpush1.xpose.msra.mxu0 %v2439
        %2524 = vmatprep.subr.mxu0 0.0
        %2525 = vmatpush1.xpose.msra.mxu0 %v2442
        %2526 = vmatprep.subr.mxu0 0.0
        %2527 = vmatpush1.xpose.msra.mxu0 %v2445
        %2528 = vmatprep.subr.mxu0 0.0
        %2529 = vmatpush1.xpose.msra.mxu0 %v2448
        %2530 = vmatprep.subr.mxu0 0.0
        %2531 = vmatpush1.xpose.msra.mxu0 %v2451
        %2532 = vmatprep.subr.mxu0 0.0
        %2533 = vmatpush1.xpose.msra.mxu0 %v2454
        %2534 = vmatprep.subr.mxu0 0.0
        %2535 = vmatpush1.xpose.msra.mxu0 %v2457
        %2536 = vmatprep.subr.mxu0 0.0
        %2537 = vmatpush1.xpose.msra.mxu0 %v2460
        %2538 = vmatprep.subr.mxu0 0.0
        %2539 = vmatpush1.xpose.msra.mxu0 %v2463
        %2540 = vmatprep.subr.mxu0 0.0
        %2541 = vmatpush1.xpose.msra.mxu0 %v2466
        %2542 = vmatprep.subr.mxu0 0.0
        %2543 = vmatpush1.xpose.msra.mxu0 %v2469
        %2544 = vmatprep.subr.mxu0 0.0
        %2545 = vmatpush1.xpose.msra.mxu0 %v2472
        %2546 = vmatprep.subr.mxu0 0.0
        %2547 = vmatpush1.xpose.msra.mxu0 %v2475
        %2548 = vmatprep.subr.mxu0 0.0
        %2549 = vmatpush1.xpose.msra.mxu0 %v2478
        %2550 = vmatprep.subr.mxu0 0.0
        %2551 = vmatpush1.xpose.msra.mxu0 %v2481
        %2552 = vmatprep.subr.mxu0 0.0
        %2553 = vmatpush1.xpose.msra.mxu0 %v2484
        %2554 = vmatprep.subr.mxu0 0.0
        %2555 = vmatpush1.xpose.msra.mxu0 %v2487
        %2556 = vmatprep.subr.mxu0 0.0
        %2557 = vmatpush1.xpose.msra.mxu0 %v2490
        %2558 = vmatprep.subr.mxu0 0.0
        %2559 = vmatpush1.xpose.msra.mxu0 %v2493
        %2560 = vmatprep.subr.mxu0 0.0
        %2561 = vmatpush1.xpose.msra.mxu0 %v2496
        %2562 = vmatprep.mubr.f32.mxu0 0.0
        %2563 = vmatmul.mubr.f32.gmra.mrb[0].mxu0 %v2397
        %v2564 = vpop.f32.mrb[0].mxu0
        %v2565 = vadd.f32 %v2389, %v2564
        %v2566 = vpop.f32.mrb[0].mxu0
        %v2567 = vadd.f32 %v2389, %v2566
        %2568 = vmatprep.mubr.f32.mxu0 0.0
        %2569 = vmatmul.mubr.f32.gmra.mrb[0].mxu0 %v2400
        %v2570 = vpop.f32.mrb[0].mxu0
        %v2571 = vadd.f32 %v2394, %v2570
        %v2572 = vpop.f32.mrb[0].mxu0
        %v2573 = vadd.f32 %v2394, %v2572
        %2574 = vdwg.mxu0
        %v2575 = vlaneseq
        %v2576 = vshrl.u32 %v2575, 7
        %v2577 = vadd.s32 %v2576, 8
        %vm2578 = vcmp.ge.s32.totalorder %v2576, 4
        %vm2579 = vcmp.ge.s32.totalorder %v2577, 4
        %v2580 = vxor.u32 %v2565, 2147483648
        %v2581 = vxor.u32 %v2567, 2147483648
        %v2582 = vxor.u32 %v2571, 2147483648
        %v2583 = vxor.u32 %v2573, 2147483648
        %v2584 = vmul.f32 %v2580, 1.442695
        %v2585 = vpow.pop %v2584
        %v2586 = vmul.f32 %v2581, 1.442695
        %v2587 = vpow.pop %v2586
        %v2588 = vmul.f32 %v2582, 1.442695
        %v2589 = vpow.pop %v2588
        %v2590 = vmul.f32 %v2583, 1.442695
        %v2591 = vpow.pop %v2590
        %v2592 = vadd.f32 %v2585, 1.0
        %v2593 = vadd.f32 %v2587, 1.0
        %v2594 = vadd.f32 %v2589, 1.0
        %v2595 = vadd.f32 %v2591, 1.0
        %v2596 = vrcp.pop %v2592
        %v2597 = vmul.f32 1.0, %v2596
        %v2598 = vrcp.pop %v2593
        %v2599 = vmul.f32 1.0, %v2598
        %v2600 = vrcp.pop %v2594
        %v2601 = vmul.f32 1.0, %v2600
        %v2602 = vrcp.pop %v2595
        %v2603 = vmul.f32 1.0, %v2602
        %v2604 = vsel %vm2578, %v2597, %v2565
        %v2605 = vsel %vm2578, %v2599, %v2567
        %v2606 = vsel %vm2579, %v2601, %v2571
        %v2607 = vsel %vm2579, %v2603, %v2573
        %2608 = vst [vmem:[%s217] sm:$0xff] %v2604
        %2609 = vst [vmem:[%s217 + $0x8] sm:$0xff] %v2605
        %2610 = vst [vmem:[%s217 + $0x10] sm:$0xff] %v2606
        %2611 = vst [vmem:[%s217 + $0x18] sm:$0xff] %v2607
        %s2612 = sand.u32 %s137, 1
        %s2613 = scalar_lea.sflag [#allocation5], %s2612
        %s2614 = sand.u32 %s137, 1
        %s2615 = smul.addr %s2614, 32
        %s2616 = scalar_lea.vmem [#allocation4], %s2615
        // Predicated region
        $region41: #{yolonas_forward.1} parent=39 // pred_check
          %p2617 = pneg %p147
        $region42: #{yolonas_forward.1} parent=39 // pred_check_branch
          %2619 = sbr.rel (%p2617) target = $region44
        $region43: #{yolonas_forward.1} parent=39 // pred_region
          %s2621 = ssub.s32 512, 512
          %2622 = vsyncadd %s2613, %s2621
          %s2623 = smul.addr %s19, 4
          %s2624 = smul.addr %s2623, 128
          %s2625 = scalar_lea.hbm %s5, %s2624
          %s2626 = sshll.u32 %s2616, 4
          %s2627 = int_to_ptr.vmem [resolvable:$true] %s2626
          %2632 = dma.vmem_to_hbm [thread:$0]  %s2627, 512, %s2625, %s2613, 256, 256, 16
        $region44: #{yolonas_forward.1} parent=39 // pred_fallthru
          _
      $region40: #{yolonas_forward.1} parent=5 // pred_fallthru
        _
      %p2633 = scmp.le.s32.totalorder 2, %s14
      // Predicated region
      $region45: #{yolonas_forward.1} parent=5 // pred_check
        %p2634 = pneg %p2633
      $region46: #{yolonas_forward.1} parent=5 // pred_check_branch
        %2636 = sbr.rel (%p2634) target = $region48
      $region47: #{yolonas_forward.1} parent=5 // pred_region
        %s2637 = ssub.s32 %s14, 2
        // Predicated region
        $region49: #{yolonas_forward.1} parent=47 // pred_check
          %p2638 = pneg %p153
        $region50: #{yolonas_forward.1} parent=47 // pred_check_branch
          %2640 = sbr.rel (%p2638) target = $region52
        $region51: #{yolonas_forward.1} parent=47 // pred_region
          %s2641 = sand.u32 %s138, 1
          %s2642 = scalar_lea.sflag [#allocation5], %s2641
          %s2643 = sand.u32 %s138, 1
          %s2644 = smul.addr %s2643, 32
          %s2645 = scalar_lea.vmem [#allocation4], %s2644
          %2646 = dma.done %s2642, 512
        $region52: #{yolonas_forward.1} parent=47 // pred_fallthru
          _
      $region48: #{yolonas_forward.1} parent=5 // pred_fallthru
        _
    $region6: #{yolonas_forward.1} parent=1 // loop_footer
      %s18 = sadd.s32 1, %s14
    $region7: #{yolonas_forward.1} parent=1 // loop_footer_branch
      %13 = sbr.rel target = $region3
    $region8: #{yolonas_forward.1} parent=1 // loop_exit
      _
    %2647 = vsyncpa [#allocation5], 1
    %s2648 = scalar_lea.sflag [#allocation5], 1
    %2649 = vsyncpa %s2648, 1

</llo_original>
